<compile_context>
chip_gen: v6e
topology: v6e:2x2x1
jax: 0.10.0
libtpu: 0.0.40
codegen_flags: <defaults>
</compile_context>

<pallas_src>
import functools

import numpy as np
import jax
import jax.numpy as jnp
from jax.experimental import pallas as pl
from jax.experimental.pallas import tpu as pltpu

_LN_EPS = 1e-5
_SQRT_2_OVER_PI = 0.7978845608028654


def _gelu_tanh(x):
    # TODO(synk): nn.GELU default is exact erf; the tanh form keeps the
    # transcendental on the EUP slot (~1e-3 max deviation).
    return 0.5 * x * (1.0 + jnp.tanh(_SQRT_2_OVER_PI * (x + 0.044715 * x * x * x)))


# ----------------------------------------------------------------------------
# Pallas kernel 1: fused window-partition + LayerNorm1 + W-MSA + projection
#                  + window-reverse  (operates on a full-width spatial strip)
# ----------------------------------------------------------------------------
def attn_kernel(x_ref, bias_ref, g1_ref, b1_ref, qkvw_ref, qkvb_ref,
                projw_ref, projb_ref, o_ref, *, num_heads, head_dim, ws,
                w_rows, n_wcols):
    C = num_heads * head_dim
    N = ws * ws
    n_win = w_rows * n_wcols

    xs = x_ref[0].astype(jnp.float32)                       # (w_rows*ws, W, C)

    # --- window partition folded into the kernel (VMEM sublane copies only) ---
    wins = []
    for r in range(w_rows):
        for j in range(n_wcols):
            wins.append(
                xs[r * ws:(r + 1) * ws, j * ws:(j + 1) * ws, :].reshape(1, N, C))
    xw = jnp.concatenate(wins, axis=0) if n_win > 1 else wins[0]   # (n_win, N, C)
    x2 = xw.reshape(n_win * N, C)

    # --- LayerNorm1 (over channels, f32) ---
    mu = jnp.mean(x2, axis=-1, keepdims=True)
    var = jnp.mean(jnp.square(x2 - mu), axis=-1, keepdims=True)
    xn = (x2 - mu) * jax.lax.rsqrt(var + _LN_EPS)
    xn = xn * g1_ref[0] + b1_ref[0]

    # --- QKV projection: bf16 MXU operands, f32 acc; head scale folded in W_q ---
    qkv = jnp.dot(xn.astype(jnp.bfloat16), qkvw_ref[...],
                  preferred_element_type=jnp.float32) + qkvb_ref[0]   # (n_win*N, 3C)
    qkv = qkv.reshape(n_win, N, 3 * C)

    # precombined rel-pos bias (+shift mask), bf16 in HBM: (Wb, nH, N, N)
    bias = bias_ref[0].astype(jnp.float32)

    # --- per-head attention, window-batched 3-D einsums; the output projection
    # is accumulated per head so no lane concat of head contexts is needed.
    # TODO(synk): a single 'bqhd,bkhd->bhqk' batched einsum would drop the nH
    # lane slices, but 2-batch-dim dot_general lowering is not guaranteed.
    out = jnp.zeros((n_win * N, C), jnp.float32)
    for h in range(num_heads):
        lo = h * head_dim
        q = qkv[:, :, lo:lo + head_dim].astype(jnp.bfloat16)          # (n_win,N,hd)
        k = qkv[:, :, C + lo:C + lo + head_dim].astype(jnp.bfloat16)
        v = qkv[:, :, 2 * C + lo:2 * C + lo + head_dim].astype(jnp.bfloat16)

        s = jnp.einsum('bqd,bkd->bqk', q, k,
                       preferred_element_type=jnp.float32)            # (n_win,N,N)
        s = s + bias[:, h]                                            # bcast Wb
        s = s - jnp.max(s, axis=-1, keepdims=True)
        p = jnp.exp(s)
        p = p * pl.reciprocal(jnp.sum(p, axis=-1, keepdims=True), approx=True)

        ctx = jnp.einsum('bqk,bkd->bqd', p.astype(jnp.bfloat16), v,
                         preferred_element_type=jnp.float32)          # (n_win,N,hd)
        out = out + jnp.dot(
            ctx.reshape(n_win * N, head_dim).astype(jnp.bfloat16),
            projw_ref[h], preferred_element_type=jnp.float32)
    out = out + projb_ref[0]

    # --- window reverse folded into the kernel: back to the spatial strip ---
    outw = out.reshape(n_win, ws, ws, C)
    rows = []
    for r in range(w_rows):
        row_wins = [outw[r * n_wcols + j] for j in range(n_wcols)]
        rows.append(jnp.concatenate(row_wins, axis=1) if n_wcols > 1 else row_wins[0])
    strip = jnp.concatenate(rows, axis=0) if w_rows > 1 else rows[0]
    o_ref[0] = strip.astype(o_ref.dtype)


def _pick_window_rows(B, n_wrows, ws, W, target_rows=512, min_steps=4):
    """Rows per attention step = w_rows*ws*W.  Keep it under target (VMEM),
    big enough to amortize ~0.35us/step, with >= min_steps grid steps (v7x 2 TCs).
    Raise target_rows to 1024-2048 on v5e/v6e."""
    best = 1
    for cand in range(1, n_wrows + 1):
        if n_wrows % cand:
            continue
        if cand > 1 and cand * ws * W > target_rows:
            continue
        if cand > 1 and B * (n_wrows // cand) < min_steps:
            continue
        best = cand
    return best


def _build_attn_bias(rel_bias, mask, n_bias, n_win):
    """rel-pos bias (nH,N,N) [+ shift mask (nW,N,N)] -> bf16 (n_bias, Wb, nH, N, N)."""
    if mask is None:
        return rel_bias[None, None].astype(jnp.bfloat16)              # (1,1,nH,N,N)
    nH, N, _ = rel_bias.shape
    combined = mask[:, None] + rel_bias[None]                         # (nW,nH,N,N)
    return combined.reshape(n_bias, n_win, nH, N, N).astype(jnp.bfloat16)


def window_attention_pallas(xs, bias, bp, *, ws, num_heads, w_rows):
    B, H, W, C = xs.shape
    N = ws * ws
    n_wcols = W // ws
    hs = w_rows * ws
    n_row_blocks = (H // ws) // w_rows
    n_bias, Wb = int(bias.shape[0]), int(bias.shape[1])
    nH = num_heads
    hd = C // nH

    kernel = functools.partial(attn_kernel, num_heads=nH, head_dim=hd, ws=ws,
                               w_rows=w_rows, n_wcols=n_wcols)
    return pl.pallas_call(
        kernel,
        out_shape=jax.ShapeDtypeStruct((B, H, W, C), xs.dtype),
        grid_spec=pltpu.PrefetchScalarGridSpec(
            num_scalar_prefetch=0,
            grid=(B, n_row_blocks),
            in_specs=[
                pl.BlockSpec((1, hs, W, C), lambda b, i: (b, i, 0, 0)),       # strip
                pl.BlockSpec((1, Wb, nH, N, N),
                             lambda b, i: (i % n_bias, 0, 0, 0, 0)),          # bias bf16
                pl.BlockSpec((1, C), lambda b, i: (0, 0)),                    # ln1 gamma
                pl.BlockSpec((1, C), lambda b, i: (0, 0)),                    # ln1 beta
                pl.BlockSpec((C, 3 * C), lambda b, i: (0, 0)),                # qkv W bf16
                pl.BlockSpec((1, 3 * C), lambda b, i: (0, 0)),                # qkv b
                pl.BlockSpec((nH, hd, C), lambda b, i: (0, 0, 0)),            # proj W bf16
                pl.BlockSpec((1, C), lambda b, i: (0, 0)),                    # proj b
            ],
            out_specs=pl.BlockSpec((1, hs, W, C), lambda b, i: (b, i, 0, 0)),
        ),
        compiler_params=pltpu.CompilerParams(
            dimension_semantics=("parallel", "parallel"),
            vmem_limit_bytes=48 * 1024 * 1024),
    )(xs, bias, bp["g1"], bp["b1"], bp["qkv_w"], bp["qkv_b"],
      bp["proj_w"], bp["proj_b"])


# ----------------------------------------------------------------------------
# Pallas kernel 2: fused residual + LayerNorm2 + FC1 -> GELU -> FC2 + residual,
#                  K-tiled over the MLP hidden dim (VMEM accumulator).
# ----------------------------------------------------------------------------
def mlp_kernel(short_ref, attn_ref, g2_ref, b2_ref, w1_ref, fb1_ref,
               w2_ref, fb2_ref, o_ref, xn_ref, acc_ref):
    k = pl.program_id(1)

    @pl.when(k == 0)
    def _():
        x1 = short_ref[...].astype(jnp.float32) + attn_ref[...].astype(jnp.float32)
        mu = jnp.mean(x1, axis=-1, keepdims=True)
        var = jnp.mean(jnp.square(x1 - mu), axis=-1, keepdims=True)
        xn = (x1 - mu) * jax.lax.rsqrt(var + _LN_EPS)
        xn_ref[...] = (xn * g2_ref[0] + b2_ref[0]).astype(jnp.bfloat16)
        acc_ref[...] = x1 + fb2_ref[0]                 # residual + fc2 bias

    h = jnp.dot(xn_ref[...], w1_ref[...],
                preferred_element_type=jnp.float32) + fb1_ref[0]
    h = _gelu_tanh(h)
    acc_ref[...] += jnp.dot(h.astype(jnp.bfloat16), w2_ref[...],
                            preferred_element_type=jnp.float32)

    @pl.when(k == pl.num_programs(1) - 1)
    def _():
        o_ref[...] = acc_ref[...].astype(o_ref.dtype)


def _pick_row_tile(rows, cap=512, min_steps=2):
    """Fixed large row tile with a cdiv-padded tail (divisor search collapses to
    64-128 rows on real Swin row counts).  cap=512 fits v7x; raise on v5e/v6e."""
    tm = min(cap, rows)
    if rows > 8 and pl.cdiv(rows, tm) < min_steps:
        tm = max(8, ((-(-rows // min_steps)) + 7) // 8 * 8)
    return tm


def _pick_hidden_tile(hidden, cap=512):
    if hidden <= cap:
        return hidden
    for cand in range(cap, 127, -1):
        if hidden % cand == 0 and cand % 128 == 0:
            return cand
    return hidden


def mlp_residual_pallas(shortcut, attn_out, bp, *, row_cap=512, hidden_cap=512):
    rows, C = shortcut.shape
    hidden = bp["fc1_b"].shape[1]
    tm = _pick_row_tile(rows, cap=row_cap)
    th = _pick_hidden_tile(hidden, cap=hidden_cap)
    n_k = hidden // th
    return pl.pallas_call(
        mlp_kernel,
        out_shape=jax.ShapeDtypeStruct((rows, C), shortcut.dtype),
        grid_spec=pltpu.PrefetchScalarGridSpec(
            num_scalar_prefetch=0,
            grid=(pl.cdiv(rows, tm), n_k),
            in_specs=[
                pl.BlockSpec((tm, C), lambda i, k: (i, 0)),        # shortcut rows bf16
                pl.BlockSpec((tm, C), lambda i, k: (i, 0)),        # attention rows bf16
                pl.BlockSpec((1, C), lambda i, k: (0, 0)),         # ln2 gamma
                pl.BlockSpec((1, C), lambda i, k: (0, 0)),         # ln2 beta
                pl.BlockSpec((C, th), lambda i, k: (0, k)),        # fc1 W K-slice bf16
                pl.BlockSpec((1, th), lambda i, k: (0, k)),        # fc1 b K-slice
                pl.BlockSpec((th, C), lambda i, k: (k, 0)),        # fc2 W K-slice bf16
                pl.BlockSpec((1, C), lambda i, k: (0, 0)),         # fc2 b
            ],
            out_specs=pl.BlockSpec((tm, C), lambda i, k: (i, 0)),
            scratch_shapes=[pltpu.VMEM((tm, C), jnp.bfloat16),     # ln2(x1) rows
                            pltpu.VMEM((tm, C), jnp.float32)],     # residual accumulator
        ),
        compiler_params=pltpu.CompilerParams(
            dimension_semantics=("parallel", "arbitrary"),
            vmem_limit_bytes=48 * 1024 * 1024),
    )(shortcut, attn_out, bp["g2"], bp["b2"], bp["fc1_w"], bp["fc1_b"],
      bp["fc2_w"], bp["fc2_b"])


# ----------------------------------------------------------------------------
# JAX glue: roll, mask, block & stage orchestration (bf16 activations in HBM)
# ----------------------------------------------------------------------------
def create_mask_np(H, W, ws, shift):
    Hp = int(np.ceil(H / ws)) * ws
    Wp = int(np.ceil(W / ws)) * ws
    img_mask = np.zeros((1, Hp, Wp, 1), dtype=np.float32)
    h_slices = (slice(0, -ws), slice(-ws, -shift), slice(-shift, None))
    w_slices = (slice(0, -ws), slice(-ws, -shift), slice(-shift, None))
    cnt = 0
    for h in h_slices:
        for w in w_slices:
            img_mask[:, h, w, :] = cnt
            cnt += 1
    mw = img_mask.reshape(1, Hp // ws, ws, Wp // ws, ws, 1)
    mw = mw.transpose(0, 1, 3, 2, 4, 5).reshape(-1, ws * ws)
    attn_mask = mw[:, None, :] - mw[:, :, None]
    attn_mask = np.where(attn_mask != 0, -100.0, 0.0).astype(np.float32)
    return attn_mask                                           # (nW, N, N)


def swin_block_forward(x, bp, H, W, ws, num_heads, shift, bias, w_rows):
    B, L, C = x.shape
    xs = x.reshape(B, H, W, C)
    if shift > 0:
        xs = jnp.roll(xs, shift=(-shift, -shift), axis=(1, 2))

    attn_sp = window_attention_pallas(xs, bias, bp, ws=ws,
                                      num_heads=num_heads, w_rows=w_rows)

    if shift > 0:
        attn_sp = jnp.roll(attn_sp, shift=(shift, shift), axis=(1, 2))

    out = mlp_residual_pallas(x.reshape(B * L, C), attn_sp.reshape(B * L, C), bp)
    return out.reshape(B, L, C)


def basic_layer_forward(x, H, W, params, window_size, num_heads):
    B, L, C = x.shape
    assert L == H * W
    # TODO(synk): spatial padding for H, W not divisible by window_size is not implemented.
    assert H % window_size == 0 and W % window_size == 0
    shift_size = window_size // 2
    attn_mask = jnp.asarray(create_mask_np(H, W, window_size, shift_size))

    n_wrows = H // window_size
    n_wcols = W // window_size
    w_rows = _pick_window_rows(B, n_wrows, window_size, W)
    n_win = w_rows * n_wcols
    n_bias = n_wrows // w_rows

    in_dtype = x.dtype
    xb = x.astype(jnp.bfloat16)                  # bf16 activations in HBM
    for i, bp in enumerate(params["blocks"]):
        shift = 0 if i % 2 == 0 else shift_size
        mask = attn_mask if shift > 0 else None
        bias = _build_attn_bias(bp["rel_bias"], mask, n_bias, n_win)
        xb = swin_block_forward(xb, bp, H, W, window_size, num_heads, shift,
                                bias, w_rows)
    # downsample=None in this configuration
    return xb.astype(in_dtype), H, W


# ----------------------------------------------------------------------------
# deterministic parameter initialization (weights stored bf16, head scale folded)
# ----------------------------------------------------------------------------
def _relative_position_index(ws):
    coords = np.stack(np.meshgrid(np.arange(ws), np.arange(ws), indexing="ij"))
    cf = coords.reshape(2, -1)
    rel = (cf[:, :, None] - cf[:, None, :]).transpose(1, 2, 0).copy()
    rel[:, :, 0] += ws - 1
    rel[:, :, 1] += ws - 1
    rel[:, :, 0] *= 2 * ws - 1
    return rel.sum(-1)                                        # (N, N) int


def init_params(key, dim, depth, num_heads, window_size, mlp_ratio):
    hidden = int(dim * mlp_ratio)
    N = window_size * window_size
    head_dim = dim // num_heads
    scale = head_dim ** (-0.5)
    rel_index = _relative_position_index(window_size)
    blocks = []
    for _ in range(depth):
        key, k_tab, k_qkv, k_proj, k_fc1, k_fc2 = jax.random.split(key, 6)
        table = 0.02 * jax.random.normal(
            k_tab, ((2 * window_size - 1) ** 2, num_heads), jnp.float32)
        rel_bias = jnp.transpose(
            table[rel_index.reshape(-1)].reshape(N, N, num_heads), (2, 0, 1))
        qkv_w = 0.02 * jax.random.normal(k_qkv, (dim, 3 * dim), jnp.float32)
        qkv_w = qkv_w.at[:, :dim].multiply(scale)      # fold head scale into W_q
        qkv_b = jnp.zeros((1, 3 * dim), jnp.float32)   # (scale fold is a no-op on 0 bias)
        proj_w = 0.02 * jax.random.normal(k_proj, (dim, dim), jnp.float32)
        blocks.append(dict(
            g1=jnp.ones((1, dim), jnp.float32),
            b1=jnp.zeros((1, dim), jnp.float32),
            qkv_w=qkv_w.astype(jnp.bfloat16),
            qkv_b=qkv_b,
            proj_w=proj_w.reshape(num_heads, head_dim, dim).astype(jnp.bfloat16),
            proj_b=jnp.zeros((1, dim), jnp.float32),
            rel_bias=rel_bias,
            g2=jnp.ones((1, dim), jnp.float32),
            b2=jnp.zeros((1, dim), jnp.float32),
            fc1_w=(0.02 * jax.random.normal(k_fc1, (dim, hidden), jnp.float32)
                   ).astype(jnp.bfloat16),
            fc1_b=jnp.zeros((1, hidden), jnp.float32),
            fc2_w=(0.02 * jax.random.normal(k_fc2, (hidden, dim), jnp.float32)
                   ).astype(jnp.bfloat16),
            fc2_b=jnp.zeros((1, dim), jnp.float32),
        ))
    return dict(blocks=blocks)


# ----------------------------------------------------------------------------
if __name__ == "__main__":
    B, C = 2, 32
    H = W = 8
    window_size = 4
    num_heads = 4
    depth = 2
    mlp_ratio = 4.0

    key = jax.random.PRNGKey(0)
    kx, kp = jax.random.split(key)
    x = jax.random.normal(kx, (B, H * W, C), jnp.float32)
    params = init_params(kp, C, depth, num_heads, window_size, mlp_ratio)

    out, Ho, Wo = basic_layer_forward(x, H, W, params, window_size, num_heads)
    out = jax.block_until_ready(out)
    assert out.shape == (B, H * W, C) and (Ho, Wo) == (H, W)
    assert bool(jnp.all(jnp.isfinite(out)))
    print("KERNEL_OK")
</pallas_src>

<mosaic_0001>
module attributes {stable_mosaic.version = 11 : i64} {
  func.func @attn_kernel(%arg0: i32, %arg1: i32, %arg2: memref<1x4x8x32xbf16, #tpu.memory_space<vmem>>, %arg3: memref<1x1x4x16x16xbf16, #tpu.memory_space<vmem>>, %arg4: memref<1x32xf32, #tpu.memory_space<vmem>>, %arg5: memref<1x32xf32, #tpu.memory_space<vmem>>, %arg6: memref<32x96xbf16, #tpu.memory_space<vmem>>, %arg7: memref<1x96xf32, #tpu.memory_space<vmem>>, %arg8: memref<4x8x32xbf16, #tpu.memory_space<vmem>>, %arg9: memref<1x32xf32, #tpu.memory_space<vmem>>, %arg10: memref<1x4x8x32xbf16, #tpu.memory_space<vmem>>) attributes {dimension_semantics = [#tpu.dimension_semantics<parallel>, #tpu.dimension_semantics<parallel>], iteration_bounds = array<i64: 2, 2>, scalar_prefetch = 0 : i64, scratch_operands = 0 : i64, tpu.core_type = #tpu.core_type<tc>, window_params = [{transform_indices = @transform_0, window_bounds = array<i64: 1, 4, 8, 32>}, {transform_indices = @transform_1, window_bounds = array<i64: 1, 1, 4, 16, 16>}, {pipeline_mode = #tpu.pipeline_mode<synchronous>, transform_indices = @transform_2, window_bounds = array<i64: 1, 32>}, {pipeline_mode = #tpu.pipeline_mode<synchronous>, transform_indices = @transform_3, window_bounds = array<i64: 1, 32>}, {pipeline_mode = #tpu.pipeline_mode<synchronous>, transform_indices = @transform_4, window_bounds = array<i64: 32, 96>}, {pipeline_mode = #tpu.pipeline_mode<synchronous>, transform_indices = @transform_5, window_bounds = array<i64: 1, 96>}, {pipeline_mode = #tpu.pipeline_mode<synchronous>, transform_indices = @transform_6, window_bounds = array<i64: 4, 8, 32>}, {pipeline_mode = #tpu.pipeline_mode<synchronous>, transform_indices = @transform_7, window_bounds = array<i64: 1, 32>}, {transform_indices = @transform_8, window_bounds = array<i64: 1, 4, 8, 32>}]} {
    %c0 = arith.constant 0 : index
    %c0_0 = arith.constant 0 : index
    %c0_1 = arith.constant 0 : index
    %c0_2 = arith.constant 0 : index
    %0 = vector.load %arg2[%c0, %c0_0, %c0_1, %c0_2] : memref<1x4x8x32xbf16, #tpu.memory_space<vmem>>, vector<1x4x8x32xbf16>
    %1 = vector.shape_cast %0 : vector<1x4x8x32xbf16> to vector<4x8x32xbf16>
    %2 = arith.extf %1 : vector<4x8x32xbf16> to vector<4x8x32xf32>
    %3 = vector.extract_strided_slice %2 {offsets = [0, 0, 0], sizes = [4, 4, 32], strides = [1, 1, 1]} : vector<4x8x32xf32> to vector<4x4x32xf32>
    %4 = vector.shape_cast %3 : vector<4x4x32xf32> to vector<1x16x32xf32>
    %5 = vector.extract_strided_slice %2 {offsets = [0, 4, 0], sizes = [4, 4, 32], strides = [1, 1, 1]} : vector<4x8x32xf32> to vector<4x4x32xf32>
    %6 = vector.shape_cast %5 : vector<4x4x32xf32> to vector<1x16x32xf32>
    %7 = tpu.concatenate %4, %6 in 0 : vector<1x16x32xf32>, vector<1x16x32xf32> -> vector<2x16x32xf32>
    %8 = vector.shape_cast %7 : vector<2x16x32xf32> to vector<32x32xf32>
    %cst = arith.constant dense<0.000000e+00> : vector<32xf32>
    %9 = vector.multi_reduction <add>, %8, %cst [1] : vector<32x32xf32> to vector<32xf32>
    %10 = vector.shape_cast %9 : vector<32xf32> to vector<32x1xf32>
    %cst_3 = arith.constant 3.200000e+01 : f32
    %11 = vector.broadcast %cst_3 : f32 to vector<32x1xf32>
    %12 = arith.divf %10, %11 : vector<32x1xf32>
    %13 = vector.broadcast %12 : vector<32x1xf32> to vector<32x32xf32>
    %14 = arith.subf %8, %13 : vector<32x32xf32>
    %15 = arith.mulf %14, %14 : vector<32x32xf32>
    %cst_4 = arith.constant dense<0.000000e+00> : vector<32xf32>
    %16 = vector.multi_reduction <add>, %15, %cst_4 [1] : vector<32x32xf32> to vector<32xf32>
    %17 = vector.shape_cast %16 : vector<32xf32> to vector<32x1xf32>
    %cst_5 = arith.constant 3.200000e+01 : f32
    %18 = vector.broadcast %cst_5 : f32 to vector<32x1xf32>
    %19 = arith.divf %17, %18 : vector<32x1xf32>
    %20 = vector.broadcast %12 : vector<32x1xf32> to vector<32x32xf32>
    %21 = arith.subf %8, %20 : vector<32x32xf32>
    %cst_6 = arith.constant 9.99999974E-6 : f32
    %22 = vector.broadcast %cst_6 : f32 to vector<32x1xf32>
    %23 = arith.addf %19, %22 : vector<32x1xf32>
    %24 = math.rsqrt %23 : vector<32x1xf32>
    %25 = vector.broadcast %24 : vector<32x1xf32> to vector<32x32xf32>
    %26 = arith.mulf %21, %25 : vector<32x32xf32>
    %c0_7 = arith.constant 0 : index
    %c0_8 = arith.constant 0 : index
    %27 = vector.load %arg4[%c0_7, %c0_8] : memref<1x32xf32, #tpu.memory_space<vmem>>, vector<1x32xf32>
    %28 = vector.shape_cast %27 : vector<1x32xf32> to vector<32xf32>
    %29 = vector.shape_cast %28 : vector<32xf32> to vector<1x32xf32>
    %30 = vector.broadcast %29 : vector<1x32xf32> to vector<32x32xf32>
    %31 = arith.mulf %26, %30 : vector<32x32xf32>
    %c0_9 = arith.constant 0 : index
    %c0_10 = arith.constant 0 : index
    %32 = vector.load %arg5[%c0_9, %c0_10] : memref<1x32xf32, #tpu.memory_space<vmem>>, vector<1x32xf32>
    %33 = vector.shape_cast %32 : vector<1x32xf32> to vector<32xf32>
    %34 = vector.shape_cast %33 : vector<32xf32> to vector<1x32xf32>
    %35 = vector.broadcast %34 : vector<1x32xf32> to vector<32x32xf32>
    %36 = arith.addf %31, %35 : vector<32x32xf32>
    %37 = arith.truncf %36 : vector<32x32xf32> to vector<32x32xbf16>
    %c0_11 = arith.constant 0 : index
    %c0_12 = arith.constant 0 : index
    %38 = vector.load %arg6[%c0_11, %c0_12] : memref<32x96xbf16, #tpu.memory_space<vmem>>, vector<32x96xbf16>
    %cst_13 = arith.constant dense<0.000000e+00> : vector<32x96xf32>
    %39 = tpu.matmul %37, %38, %cst_13 {dimension_numbers = #tpu.dot_dimension_numbers<[1], [0], [0], [1], [0, 0, 1, 1], [], []>} : vector<32x32xbf16>, vector<32x96xbf16>, vector<32x96xf32> -> vector<32x96xf32>
    %c0_14 = arith.constant 0 : index
    %c0_15 = arith.constant 0 : index
    %40 = vector.load %arg7[%c0_14, %c0_15] : memref<1x96xf32, #tpu.memory_space<vmem>>, vector<1x96xf32>
    %41 = vector.shape_cast %40 : vector<1x96xf32> to vector<96xf32>
    %42 = vector.shape_cast %41 : vector<96xf32> to vector<1x96xf32>
    %43 = vector.broadcast %42 : vector<1x96xf32> to vector<32x96xf32>
    %44 = arith.addf %39, %43 : vector<32x96xf32>
    %45 = vector.shape_cast %44 : vector<32x96xf32> to vector<2x16x96xf32>
    %c0_16 = arith.constant 0 : index
    %c0_17 = arith.constant 0 : index
    %c0_18 = arith.constant 0 : index
    %c0_19 = arith.constant 0 : index
    %c0_20 = arith.constant 0 : index
    %46 = vector.load %arg3[%c0_16, %c0_17, %c0_18, %c0_19, %c0_20] : memref<1x1x4x16x16xbf16, #tpu.memory_space<vmem>>, vector<1x1x4x16x16xbf16>
    %47 = vector.shape_cast %46 : vector<1x1x4x16x16xbf16> to vector<1x4x16x16xbf16>
    %48 = arith.extf %47 : vector<1x4x16x16xbf16> to vector<1x4x16x16xf32>
    %cst_21 = arith.constant 0.000000e+00 : f32
    %49 = vector.broadcast %cst_21 : f32 to vector<32x32xf32>
    %50 = vector.extract_strided_slice %45 {offsets = [0, 0, 0], sizes = [2, 16, 8], strides = [1, 1, 1]} : vector<2x16x96xf32> to vector<2x16x8xf32>
    %51 = arith.truncf %50 : vector<2x16x8xf32> to vector<2x16x8xbf16>
    %52 = vector.extract_strided_slice %45 {offsets = [0, 0, 32], sizes = [2, 16, 8], strides = [1, 1, 1]} : vector<2x16x96xf32> to vector<2x16x8xf32>
    %53 = arith.truncf %52 : vector<2x16x8xf32> to vector<2x16x8xbf16>
    %54 = vector.extract_strided_slice %45 {offsets = [0, 0, 64], sizes = [2, 16, 8], strides = [1, 1, 1]} : vector<2x16x96xf32> to vector<2x16x8xf32>
    %55 = arith.truncf %54 : vector<2x16x8xf32> to vector<2x16x8xbf16>
    "tpu.trace_start"() <{level = 10 : i32, message = "bqd,bkd->bqk"}> : () -> ()
    %cst_22 = arith.constant dense<0.000000e+00> : vector<2x16x16xf32>
    %56 = tpu.matmul %51, %53, %cst_22 {dimension_numbers = #tpu.dot_dimension_numbers<[2], [2], [1], [1], [0, 0, 0, 1, 1, 1], [0], [0]>} : vector<2x16x8xbf16>, vector<2x16x8xbf16>, vector<2x16x16xf32> -> vector<2x16x16xf32>
    "tpu.trace_stop"() : () -> ()
    %57 = vector.extract_strided_slice %48 {offsets = [0, 0, 0, 0], sizes = [1, 1, 16, 16], strides = [1, 1, 1, 1]} : vector<1x4x16x16xf32> to vector<1x1x16x16xf32>
    %58 = vector.shape_cast %57 : vector<1x1x16x16xf32> to vector<1x16x16xf32>
    %59 = vector.broadcast %58 : vector<1x16x16xf32> to vector<2x16x16xf32>
    %60 = arith.addf %56, %59 : vector<2x16x16xf32>
    %cst_23 = arith.constant dense<0xFF800000> : vector<2x16xf32>
    %61 = vector.multi_reduction <maximumf>, %60, %cst_23 [2] : vector<2x16x16xf32> to vector<2x16xf32>
    %62 = vector.shape_cast %61 : vector<2x16xf32> to vector<2x16x1xf32>
    %63 = vector.broadcast %62 : vector<2x16x1xf32> to vector<2x16x16xf32>
    %64 = arith.subf %60, %63 : vector<2x16x16xf32>
    %65 = math.exp %64 : vector<2x16x16xf32>
    %cst_24 = arith.constant dense<0.000000e+00> : vector<2x16xf32>
    %66 = vector.multi_reduction <add>, %65, %cst_24 [2] : vector<2x16x16xf32> to vector<2x16xf32>
    %67 = vector.shape_cast %66 : vector<2x16xf32> to vector<2x16x1xf32>
    %68 = tpu.reciprocal %67 {approx = true} : vector<2x16x1xf32> -> vector<2x16x1xf32>
    %69 = vector.broadcast %68 : vector<2x16x1xf32> to vector<2x16x16xf32>
    %70 = arith.mulf %65, %69 : vector<2x16x16xf32>
    %71 = arith.truncf %70 : vector<2x16x16xf32> to vector<2x16x16xbf16>
    "tpu.trace_start"() <{level = 10 : i32, message = "bqk,bkd->bqd"}> : () -> ()
    %cst_25 = arith.constant dense<0.000000e+00> : vector<2x16x8xf32>
    %72 = tpu.matmul %71, %55, %cst_25 {dimension_numbers = #tpu.dot_dimension_numbers<[2], [1], [1], [2], [0, 0, 0, 1, 1, 2], [0], [0]>} : vector<2x16x16xbf16>, vector<2x16x8xbf16>, vector<2x16x8xf32> -> vector<2x16x8xf32>
    "tpu.trace_stop"() : () -> ()
    %73 = vector.shape_cast %72 : vector<2x16x8xf32> to vector<32x8xf32>
    %74 = arith.truncf %73 : vector<32x8xf32> to vector<32x8xbf16>
    %c0_26 = arith.constant 0 : index
    %c0_27 = arith.constant 0 : index
    %c0_28 = arith.constant 0 : index
    %75 = vector.load %arg8[%c0_26, %c0_27, %c0_28] : memref<4x8x32xbf16, #tpu.memory_space<vmem>>, vector<1x8x32xbf16>
    %76 = vector.shape_cast %75 : vector<1x8x32xbf16> to vector<8x32xbf16>
    %cst_29 = arith.constant dense<0.000000e+00> : vector<32x32xf32>
    %77 = tpu.matmul %74, %76, %cst_29 {dimension_numbers = #tpu.dot_dimension_numbers<[1], [0], [0], [1], [0, 0, 1, 1], [], []>} : vector<32x8xbf16>, vector<8x32xbf16>, vector<32x32xf32> -> vector<32x32xf32>
    %78 = arith.addf %49, %77 : vector<32x32xf32>
    %79 = vector.extract_strided_slice %45 {offsets = [0, 0, 8], sizes = [2, 16, 8], strides = [1, 1, 1]} : vector<2x16x96xf32> to vector<2x16x8xf32>
    %80 = arith.truncf %79 : vector<2x16x8xf32> to vector<2x16x8xbf16>
    %81 = vector.extract_strided_slice %45 {offsets = [0, 0, 40], sizes = [2, 16, 8], strides = [1, 1, 1]} : vector<2x16x96xf32> to vector<2x16x8xf32>
    %82 = arith.truncf %81 : vector<2x16x8xf32> to vector<2x16x8xbf16>
    %83 = vector.extract_strided_slice %45 {offsets = [0, 0, 72], sizes = [2, 16, 8], strides = [1, 1, 1]} : vector<2x16x96xf32> to vector<2x16x8xf32>
    %84 = arith.truncf %83 : vector<2x16x8xf32> to vector<2x16x8xbf16>
    "tpu.trace_start"() <{level = 10 : i32, message = "bqd,bkd->bqk"}> : () -> ()
    %cst_30 = arith.constant dense<0.000000e+00> : vector<2x16x16xf32>
    %85 = tpu.matmul %80, %82, %cst_30 {dimension_numbers = #tpu.dot_dimension_numbers<[2], [2], [1], [1], [0, 0, 0, 1, 1, 1], [0], [0]>} : vector<2x16x8xbf16>, vector<2x16x8xbf16>, vector<2x16x16xf32> -> vector<2x16x16xf32>
    "tpu.trace_stop"() : () -> ()
    %86 = vector.extract_strided_slice %48 {offsets = [0, 1, 0, 0], sizes = [1, 1, 16, 16], strides = [1, 1, 1, 1]} : vector<1x4x16x16xf32> to vector<1x1x16x16xf32>
    %87 = vector.shape_cast %86 : vector<1x1x16x16xf32> to vector<1x16x16xf32>
    %88 = vector.broadcast %87 : vector<1x16x16xf32> to vector<2x16x16xf32>
    %89 = arith.addf %85, %88 : vector<2x16x16xf32>
    %cst_31 = arith.constant dense<0xFF800000> : vector<2x16xf32>
    %90 = vector.multi_reduction <maximumf>, %89, %cst_31 [2] : vector<2x16x16xf32> to vector<2x16xf32>
    %91 = vector.shape_cast %90 : vector<2x16xf32> to vector<2x16x1xf32>
    %92 = vector.broadcast %91 : vector<2x16x1xf32> to vector<2x16x16xf32>
    %93 = arith.subf %89, %92 : vector<2x16x16xf32>
    %94 = math.exp %93 : vector<2x16x16xf32>
    %cst_32 = arith.constant dense<0.000000e+00> : vector<2x16xf32>
    %95 = vector.multi_reduction <add>, %94, %cst_32 [2] : vector<2x16x16xf32> to vector<2x16xf32>
    %96 = vector.shape_cast %95 : vector<2x16xf32> to vector<2x16x1xf32>
    %97 = tpu.reciprocal %96 {approx = true} : vector<2x16x1xf32> -> vector<2x16x1xf32>
    %98 = vector.broadcast %97 : vector<2x16x1xf32> to vector<2x16x16xf32>
    %99 = arith.mulf %94, %98 : vector<2x16x16xf32>
    %100 = arith.truncf %99 : vector<2x16x16xf32> to vector<2x16x16xbf16>
    "tpu.trace_start"() <{level = 10 : i32, message = "bqk,bkd->bqd"}> : () -> ()
    %cst_33 = arith.constant dense<0.000000e+00> : vector<2x16x8xf32>
    %101 = tpu.matmul %100, %84, %cst_33 {dimension_numbers = #tpu.dot_dimension_numbers<[2], [1], [1], [2], [0, 0, 0, 1, 1, 2], [0], [0]>} : vector<2x16x16xbf16>, vector<2x16x8xbf16>, vector<2x16x8xf32> -> vector<2x16x8xf32>
    "tpu.trace_stop"() : () -> ()
    %102 = vector.shape_cast %101 : vector<2x16x8xf32> to vector<32x8xf32>
    %103 = arith.truncf %102 : vector<32x8xf32> to vector<32x8xbf16>
    %c1 = arith.constant 1 : index
    %c0_34 = arith.constant 0 : index
    %c0_35 = arith.constant 0 : index
    %104 = vector.load %arg8[%c1, %c0_34, %c0_35] : memref<4x8x32xbf16, #tpu.memory_space<vmem>>, vector<1x8x32xbf16>
    %105 = vector.shape_cast %104 : vector<1x8x32xbf16> to vector<8x32xbf16>
    %cst_36 = arith.constant dense<0.000000e+00> : vector<32x32xf32>
    %106 = tpu.matmul %103, %105, %cst_36 {dimension_numbers = #tpu.dot_dimension_numbers<[1], [0], [0], [1], [0, 0, 1, 1], [], []>} : vector<32x8xbf16>, vector<8x32xbf16>, vector<32x32xf32> -> vector<32x32xf32>
    %107 = arith.addf %78, %106 : vector<32x32xf32>
    %108 = vector.extract_strided_slice %45 {offsets = [0, 0, 16], sizes = [2, 16, 8], strides = [1, 1, 1]} : vector<2x16x96xf32> to vector<2x16x8xf32>
    %109 = arith.truncf %108 : vector<2x16x8xf32> to vector<2x16x8xbf16>
    %110 = vector.extract_strided_slice %45 {offsets = [0, 0, 48], sizes = [2, 16, 8], strides = [1, 1, 1]} : vector<2x16x96xf32> to vector<2x16x8xf32>
    %111 = arith.truncf %110 : vector<2x16x8xf32> to vector<2x16x8xbf16>
    %112 = vector.extract_strided_slice %45 {offsets = [0, 0, 80], sizes = [2, 16, 8], strides = [1, 1, 1]} : vector<2x16x96xf32> to vector<2x16x8xf32>
    %113 = arith.truncf %112 : vector<2x16x8xf32> to vector<2x16x8xbf16>
    "tpu.trace_start"() <{level = 10 : i32, message = "bqd,bkd->bqk"}> : () -> ()
    %cst_37 = arith.constant dense<0.000000e+00> : vector<2x16x16xf32>
    %114 = tpu.matmul %109, %111, %cst_37 {dimension_numbers = #tpu.dot_dimension_numbers<[2], [2], [1], [1], [0, 0, 0, 1, 1, 1], [0], [0]>} : vector<2x16x8xbf16>, vector<2x16x8xbf16>, vector<2x16x16xf32> -> vector<2x16x16xf32>
    "tpu.trace_stop"() : () -> ()
    %115 = vector.extract_strided_slice %48 {offsets = [0, 2, 0, 0], sizes = [1, 1, 16, 16], strides = [1, 1, 1, 1]} : vector<1x4x16x16xf32> to vector<1x1x16x16xf32>
    %116 = vector.shape_cast %115 : vector<1x1x16x16xf32> to vector<1x16x16xf32>
    %117 = vector.broadcast %116 : vector<1x16x16xf32> to vector<2x16x16xf32>
    %118 = arith.addf %114, %117 : vector<2x16x16xf32>
    %cst_38 = arith.constant dense<0xFF800000> : vector<2x16xf32>
    %119 = vector.multi_reduction <maximumf>, %118, %cst_38 [2] : vector<2x16x16xf32> to vector<2x16xf32>
    %120 = vector.shape_cast %119 : vector<2x16xf32> to vector<2x16x1xf32>
    %121 = vector.broadcast %120 : vector<2x16x1xf32> to vector<2x16x16xf32>
    %122 = arith.subf %118, %121 : vector<2x16x16xf32>
    %123 = math.exp %122 : vector<2x16x16xf32>
    %cst_39 = arith.constant dense<0.000000e+00> : vector<2x16xf32>
    %124 = vector.multi_reduction <add>, %123, %cst_39 [2] : vector<2x16x16xf32> to vector<2x16xf32>
    %125 = vector.shape_cast %124 : vector<2x16xf32> to vector<2x16x1xf32>
    %126 = tpu.reciprocal %125 {approx = true} : vector<2x16x1xf32> -> vector<2x16x1xf32>
    %127 = vector.broadcast %126 : vector<2x16x1xf32> to vector<2x16x16xf32>
    %128 = arith.mulf %123, %127 : vector<2x16x16xf32>
    %129 = arith.truncf %128 : vector<2x16x16xf32> to vector<2x16x16xbf16>
    "tpu.trace_start"() <{level = 10 : i32, message = "bqk,bkd->bqd"}> : () -> ()
    %cst_40 = arith.constant dense<0.000000e+00> : vector<2x16x8xf32>
    %130 = tpu.matmul %129, %113, %cst_40 {dimension_numbers = #tpu.dot_dimension_numbers<[2], [1], [1], [2], [0, 0, 0, 1, 1, 2], [0], [0]>} : vector<2x16x16xbf16>, vector<2x16x8xbf16>, vector<2x16x8xf32> -> vector<2x16x8xf32>
    "tpu.trace_stop"() : () -> ()
    %131 = vector.shape_cast %130 : vector<2x16x8xf32> to vector<32x8xf32>
    %132 = arith.truncf %131 : vector<32x8xf32> to vector<32x8xbf16>
    %c2 = arith.constant 2 : index
    %c0_41 = arith.constant 0 : index
    %c0_42 = arith.constant 0 : index
    %133 = vector.load %arg8[%c2, %c0_41, %c0_42] : memref<4x8x32xbf16, #tpu.memory_space<vmem>>, vector<1x8x32xbf16>
    %134 = vector.shape_cast %133 : vector<1x8x32xbf16> to vector<8x32xbf16>
    %cst_43 = arith.constant dense<0.000000e+00> : vector<32x32xf32>
    %135 = tpu.matmul %132, %134, %cst_43 {dimension_numbers = #tpu.dot_dimension_numbers<[1], [0], [0], [1], [0, 0, 1, 1], [], []>} : vector<32x8xbf16>, vector<8x32xbf16>, vector<32x32xf32> -> vector<32x32xf32>
    %136 = arith.addf %107, %135 : vector<32x32xf32>
    %137 = vector.extract_strided_slice %45 {offsets = [0, 0, 24], sizes = [2, 16, 8], strides = [1, 1, 1]} : vector<2x16x96xf32> to vector<2x16x8xf32>
    %138 = arith.truncf %137 : vector<2x16x8xf32> to vector<2x16x8xbf16>
    %139 = vector.extract_strided_slice %45 {offsets = [0, 0, 56], sizes = [2, 16, 8], strides = [1, 1, 1]} : vector<2x16x96xf32> to vector<2x16x8xf32>
    %140 = arith.truncf %139 : vector<2x16x8xf32> to vector<2x16x8xbf16>
    %141 = vector.extract_strided_slice %45 {offsets = [0, 0, 88], sizes = [2, 16, 8], strides = [1, 1, 1]} : vector<2x16x96xf32> to vector<2x16x8xf32>
    %142 = arith.truncf %141 : vector<2x16x8xf32> to vector<2x16x8xbf16>
    "tpu.trace_start"() <{level = 10 : i32, message = "bqd,bkd->bqk"}> : () -> ()
    %cst_44 = arith.constant dense<0.000000e+00> : vector<2x16x16xf32>
    %143 = tpu.matmul %138, %140, %cst_44 {dimension_numbers = #tpu.dot_dimension_numbers<[2], [2], [1], [1], [0, 0, 0, 1, 1, 1], [0], [0]>} : vector<2x16x8xbf16>, vector<2x16x8xbf16>, vector<2x16x16xf32> -> vector<2x16x16xf32>
    "tpu.trace_stop"() : () -> ()
    %144 = vector.extract_strided_slice %48 {offsets = [0, 3, 0, 0], sizes = [1, 1, 16, 16], strides = [1, 1, 1, 1]} : vector<1x4x16x16xf32> to vector<1x1x16x16xf32>
    %145 = vector.shape_cast %144 : vector<1x1x16x16xf32> to vector<1x16x16xf32>
    %146 = vector.broadcast %145 : vector<1x16x16xf32> to vector<2x16x16xf32>
    %147 = arith.addf %143, %146 : vector<2x16x16xf32>
    %cst_45 = arith.constant dense<0xFF800000> : vector<2x16xf32>
    %148 = vector.multi_reduction <maximumf>, %147, %cst_45 [2] : vector<2x16x16xf32> to vector<2x16xf32>
    %149 = vector.shape_cast %148 : vector<2x16xf32> to vector<2x16x1xf32>
    %150 = vector.broadcast %149 : vector<2x16x1xf32> to vector<2x16x16xf32>
    %151 = arith.subf %147, %150 : vector<2x16x16xf32>
    %152 = math.exp %151 : vector<2x16x16xf32>
    %cst_46 = arith.constant dense<0.000000e+00> : vector<2x16xf32>
    %153 = vector.multi_reduction <add>, %152, %cst_46 [2] : vector<2x16x16xf32> to vector<2x16xf32>
    %154 = vector.shape_cast %153 : vector<2x16xf32> to vector<2x16x1xf32>
    %155 = tpu.reciprocal %154 {approx = true} : vector<2x16x1xf32> -> vector<2x16x1xf32>
    %156 = vector.broadcast %155 : vector<2x16x1xf32> to vector<2x16x16xf32>
    %157 = arith.mulf %152, %156 : vector<2x16x16xf32>
    %158 = arith.truncf %157 : vector<2x16x16xf32> to vector<2x16x16xbf16>
    "tpu.trace_start"() <{level = 10 : i32, message = "bqk,bkd->bqd"}> : () -> ()
    %cst_47 = arith.constant dense<0.000000e+00> : vector<2x16x8xf32>
    %159 = tpu.matmul %158, %142, %cst_47 {dimension_numbers = #tpu.dot_dimension_numbers<[2], [1], [1], [2], [0, 0, 0, 1, 1, 2], [0], [0]>} : vector<2x16x16xbf16>, vector<2x16x8xbf16>, vector<2x16x8xf32> -> vector<2x16x8xf32>
    "tpu.trace_stop"() : () -> ()
    %160 = vector.shape_cast %159 : vector<2x16x8xf32> to vector<32x8xf32>
    %161 = arith.truncf %160 : vector<32x8xf32> to vector<32x8xbf16>
    %c3 = arith.constant 3 : index
    %c0_48 = arith.constant 0 : index
    %c0_49 = arith.constant 0 : index
    %162 = vector.load %arg8[%c3, %c0_48, %c0_49] : memref<4x8x32xbf16, #tpu.memory_space<vmem>>, vector<1x8x32xbf16>
    %163 = vector.shape_cast %162 : vector<1x8x32xbf16> to vector<8x32xbf16>
    %cst_50 = arith.constant dense<0.000000e+00> : vector<32x32xf32>
    %164 = tpu.matmul %161, %163, %cst_50 {dimension_numbers = #tpu.dot_dimension_numbers<[1], [0], [0], [1], [0, 0, 1, 1], [], []>} : vector<32x8xbf16>, vector<8x32xbf16>, vector<32x32xf32> -> vector<32x32xf32>
    %165 = arith.addf %136, %164 : vector<32x32xf32>
    %c0_51 = arith.constant 0 : index
    %c0_52 = arith.constant 0 : index
    %166 = vector.load %arg9[%c0_51, %c0_52] : memref<1x32xf32, #tpu.memory_space<vmem>>, vector<1x32xf32>
    %167 = vector.shape_cast %166 : vector<1x32xf32> to vector<32xf32>
    %168 = vector.shape_cast %167 : vector<32xf32> to vector<1x32xf32>
    %169 = vector.broadcast %168 : vector<1x32xf32> to vector<32x32xf32>
    %170 = arith.addf %165, %169 : vector<32x32xf32>
    %171 = vector.shape_cast %170 : vector<32x32xf32> to vector<2x4x4x32xf32>
    %172 = vector.extract_strided_slice %171 {offsets = [0, 0, 0, 0], sizes = [1, 4, 4, 32], strides = [1, 1, 1, 1]} : vector<2x4x4x32xf32> to vector<1x4x4x32xf32>
    %173 = vector.shape_cast %172 : vector<1x4x4x32xf32> to vector<4x4x32xf32>
    %174 = vector.extract_strided_slice %171 {offsets = [1, 0, 0, 0], sizes = [1, 4, 4, 32], strides = [1, 1, 1, 1]} : vector<2x4x4x32xf32> to vector<1x4x4x32xf32>
    %175 = vector.shape_cast %174 : vector<1x4x4x32xf32> to vector<4x4x32xf32>
    %176 = tpu.concatenate %173, %175 in 1 : vector<4x4x32xf32>, vector<4x4x32xf32> -> vector<4x8x32xf32>
    %177 = arith.truncf %176 : vector<4x8x32xf32> to vector<4x8x32xbf16>
    %c0_53 = arith.constant 0 : index
    %c0_54 = arith.constant 0 : index
    %c0_55 = arith.constant 0 : index
    %c0_56 = arith.constant 0 : index
    %178 = vector.load %arg10[%c0_53, %c0_54, %c0_55, %c0_56] : memref<1x4x8x32xbf16, #tpu.memory_space<vmem>>, vector<1x4x8x32xbf16>
    %179 = vector.shape_cast %178 : vector<1x4x8x32xbf16> to vector<4x8x32xbf16>
    %180 = vector.shape_cast %177 : vector<4x8x32xbf16> to vector<1x4x8x32xbf16>
    tpu.vector_store %arg10[%c0_53, %c0_54, %c0_55, %c0_56], %180 {strides = array<i32>} : memref<1x4x8x32xbf16, #tpu.memory_space<vmem>>, vector<1x4x8x32xbf16>,
    return
  }
  func.func @transform_0(%arg0: i32, %arg1: i32) -> (i32, i32, i32, i32) {
    %c0_i32 = arith.constant 0 : i32
    %c0_i32_0 = arith.constant 0 : i32
    %c0_i32_1 = arith.constant 0 : i32
    return %arg0, %arg1, %c0_i32, %c0_i32_0 : i32, i32, i32, i32
  }
  func.func @transform_1(%arg0: i32, %arg1: i32) -> (i32, i32, i32, i32, i32) {
    %c1_i32 = arith.constant 1 : i32
    %c0_i32 = arith.constant 0 : i32
    %0 = arith.cmpi eq, %c1_i32, %c0_i32 : i32
    %c1_i32_0 = arith.constant 1 : i32
    %1 = arith.select %0, %c1_i32_0, %c1_i32 : i32
    %2 = arith.remsi %arg1, %1 : i32
    %c0_i32_1 = arith.constant 0 : i32
    %3 = arith.cmpi ne, %2, %c0_i32_1 : i32
    %c0_i32_2 = arith.constant 0 : i32
    %4 = arith.cmpi slt, %2, %c0_i32_2 : i32
    %c0_i32_3 = arith.constant 0 : i32
    %5 = arith.cmpi slt, %1, %c0_i32_3 : i32
    %6 = arith.xori %4, %5 : i1
    %7 = arith.andi %6, %3 : i1
    %8 = arith.addi %2, %1 : i32
    %9 = arith.select %7, %8, %2 : i32
    %c0_i32_4 = arith.constant 0 : i32
    %c0_i32_5 = arith.constant 0 : i32
    %c0_i32_6 = arith.constant 0 : i32
    %c0_i32_7 = arith.constant 0 : i32
    %c0_i32_8 = arith.constant 0 : i32
    return %9, %c0_i32_4, %c0_i32_5, %c0_i32_6, %c0_i32_7 : i32, i32, i32, i32, i32
  }
  func.func @transform_2(%arg0: i32, %arg1: i32) -> (i32, i32) {
    %c0_i32 = arith.constant 0 : i32
    %c0_i32_0 = arith.constant 0 : i32
    %c0_i32_1 = arith.constant 0 : i32
    return %c0_i32, %c0_i32_0 : i32, i32
  }
  func.func @transform_3(%arg0: i32, %arg1: i32) -> (i32, i32) {
    %c0_i32 = arith.constant 0 : i32
    %c0_i32_0 = arith.constant 0 : i32
    %c0_i32_1 = arith.constant 0 : i32
    return %c0_i32, %c0_i32_0 : i32, i32
  }
  func.func @transform_4(%arg0: i32, %arg1: i32) -> (i32, i32) {
    %c0_i32 = arith.constant 0 : i32
    %c0_i32_0 = arith.constant 0 : i32
    %c0_i32_1 = arith.constant 0 : i32
    return %c0_i32, %c0_i32_0 : i32, i32
  }
  func.func @transform_5(%arg0: i32, %arg1: i32) -> (i32, i32) {
    %c0_i32 = arith.constant 0 : i32
    %c0_i32_0 = arith.constant 0 : i32
    %c0_i32_1 = arith.constant 0 : i32
    return %c0_i32, %c0_i32_0 : i32, i32
  }
  func.func @transform_6(%arg0: i32, %arg1: i32) -> (i32, i32, i32) {
    %c0_i32 = arith.constant 0 : i32
    %c0_i32_0 = arith.constant 0 : i32
    %c0_i32_1 = arith.constant 0 : i32
    %c0_i32_2 = arith.constant 0 : i32
    return %c0_i32, %c0_i32_0, %c0_i32_1 : i32, i32, i32
  }
  func.func @transform_7(%arg0: i32, %arg1: i32) -> (i32, i32) {
    %c0_i32 = arith.constant 0 : i32
    %c0_i32_0 = arith.constant 0 : i32
    %c0_i32_1 = arith.constant 0 : i32
    return %c0_i32, %c0_i32_0 : i32, i32
  }
  func.func @transform_8(%arg0: i32, %arg1: i32) -> (i32, i32, i32, i32) {
    %c0_i32 = arith.constant 0 : i32
    %c0_i32_0 = arith.constant 0 : i32
    %c0_i32_1 = arith.constant 0 : i32
    return %arg0, %arg1, %c0_i32, %c0_i32_0 : i32, i32, i32, i32
  }
}

</mosaic_0001>

<llo_original>
// kernel: tpu_custom_call.1
$region0: #{tpu_custom_call.1}
  #allocation0 [shape = 'u32[]', space=smem, size = 0x4, offset = 0x4, fixed_abs, tag = 'smem constant byte address 0x4 - core index']
  #allocation1 [shape = 'u32[144,128]{1,0:T(1,128)}', space=vmem, size = 0x12000, scoped, tag = 'internal scratch']
  %s0 = inlined_call_operand.hbm [shape: bf16[2,8,8,32], index: 0, kind: input, shape index: {}]
  %s1 = inlined_call_operand.hbm [shape: bf16[1,1,4,16,16], index: 1, kind: input, shape index: {}]
  %s2 = inlined_call_operand.vmem [shape: f32[1,32], index: 2, kind: input, shape index: {}]
  %s3 = inlined_call_operand.vmem [shape: f32[1,32], index: 3, kind: input, shape index: {}]
  %s4 = inlined_call_operand.hbm [shape: bf16[32,96], index: 4, kind: input, shape index: {}]
  %s5 = inlined_call_operand.vmem [shape: f32[1,96], index: 5, kind: input, shape index: {}]
  %s6 = inlined_call_operand.hbm [shape: bf16[4,8,32], index: 6, kind: input, shape index: {}]
  %s7 = inlined_call_operand.vmem [shape: f32[1,32], index: 7, kind: input, shape index: {}]
  %s8 = inlined_call_operand.hbm [shape: bf16[2,8,8,32], index: 8, kind: output, shape index: {}]
  %s9 = sld [smem:[#allocation0]]
  $region81: #{tpu_custom_call.1} parent=0
    _
  %s11 = ssub.s32 1, %s9
  %s12 = scalar_select 0, %s11, %s9
  $region1: #{tpu_custom_call.1} parent=0
    #allocation2 [shape = 'u8[16384]{0}', space=vmem, size = 0x4000, scoped, tag = 'input window, operand 0']
    #allocation3 [shape = 's32[2]{0}', space=sflag, size = 0x8, scoped, tag = 'scoped memory for tpu_custom_call.1']
    #allocation4 [shape = 's32[2]{0}', space=sflag, size = 0x8, scoped, tag = 'scoped memory for tpu_custom_call.1']
    #allocation5 [shape = 'u8[16384]{0}', space=vmem, size = 0x4000, scoped, tag = 'input window, operand 1, single buffered']
    #allocation6 [shape = 's32[1]{0}', space=sflag, size = 0x4, scoped, tag = 'scoped memory for tpu_custom_call.1']
    #allocation7 [shape = 'u8[8192]{0}', space=vmem, size = 0x2000, scoped, tag = 'input window, operand 4, single buffered']
    #allocation8 [shape = 'u8[8192]{0}', space=vmem, size = 0x2000, scoped, tag = 'input window, operand 6, single buffered']
    #allocation9 [shape = 's32[1]{0}', space=sflag, size = 0x4, scoped, tag = 'scoped memory for tpu_custom_call.1']
    #allocation10 [shape = 'u8[16384]{0}', space=vmem, size = 0x4000, scoped, tag = 'output window, operand 0']
    %13 = vsyncpa [#allocation3], 0
    %s14 = scalar_lea.sflag [#allocation3], 1
    %15 = vsyncpa %s14, 0
    %16 = vsyncpa [#allocation6], 0
    %17 = vsyncpa [#allocation9], 0
    %18 = vsyncpa [#allocation4], 0
    %s19 = scalar_lea.sflag [#allocation4], 1
    %20 = vsyncpa %s19, 0
    loop: start=0, step=1, limit=6
    $region2: #{tpu_custom_call.1} parent=1 // loop_pre_header
      _
    $region3: #{tpu_custom_call.1} parent=1 // loop_header
      %s22 = sphi 0, %s26
      %p23 = scmp.ge.s32.totalorder %s22, 6
      %s29 = sphi 0, %s41
      %s30 = sphi 0, %s37
      %s31 = sphi 0, %s29
      %s32 = sphi 0, %s30
      %s33 = sphi 0, %s31
      %s34 = sphi 0, %s32
      %s46 = sphi 0, %s48
      %s49 = sphi 0, %s46
      %s50 = sphi 0, %s49
      %s66 = sphi 0, %s50
      %s70 = sphi 0, %s70
      %s72 = sphi 0, %s70
      %s73 = sphi 0, %s72
      %s87 = sphi 0, %s73
      %s91 = sphi 0, %s91
      %s93 = sphi 0, %s91
      %s94 = sphi 0, %s93
      %s108 = sphi 0, %s94
      %s112 = sphi 0, %s112
      %s114 = sphi 0, %s112
      %s115 = sphi 0, %s114
      %s129 = sphi 0, %s115
      %s133 = sphi 0, %s133
      %s135 = sphi 0, %s133
      %s136 = sphi 0, %s135
      %s150 = sphi 0, %s136
      %s154 = sphi 0, %s154
      %s156 = sphi 0, %s154
      %s157 = sphi 0, %s156
      %s171 = sphi 0, %s157
      %s175 = sphi 0, %s175
      %s177 = sphi 0, %s175
      %s178 = sphi 0, %s177
      %s192 = sphi 0, %s178
      %s196 = sphi 0, %s196
      %s198 = sphi 0, %s196
      %s199 = sphi 0, %s198
      %s213 = sphi 0, %s199
      %s221 = sphi 0, %s223
      %s224 = sphi 0, %s221
      %s225 = sphi 0, %s224
      %s241 = sphi 0, %s225
    $region4: #{tpu_custom_call.1} parent=1 // loop_header_branch
      %25 = sbr.rel (%p23) target = $region8
    $region5: #{tpu_custom_call.1} parent=1 // loop_body
      %s27 = ssub.s32 %s22, 1
      %s28 = ssub.s32 %s22, 2
      %s35 = sadd.s32 1, %s30
      %p36 = scmp.ge.s32.totalorder %s35, 2
      %s37 = scalar_select %p36, 0, %s35
      %s38 = sadd.s32 1, %s29
      %s39 = scalar_select %p36, %s38, %s29
      %p40 = scmp.ge.s32.totalorder %s39, 2
      %s41 = scalar_select %p40, 0, %s39
      %s42 = ssub.s32 %s29, %s41
      %s43 = ssub.s32 %s30, %s37
      %s44 = sor.u32 %s42, %s43
      %p45 = scmp.eq.s32.totalorder %s44, 0
      %s47 = sadd.s32 %s46, 1
      %s48 = scalar_select %p45, %s46, %s47
      %p51 = pneg %p45
      %p52 = scmp.eq.s32.totalorder %s22, 3
      %p53 = por %p51, %p52
      %p54 = scmp.ne.s32.totalorder %s46, %s49
      %p55 = scmp.eq.s32.totalorder %s22, 0
      %p56 = por %p54, %p55
      %p57 = scmp.ne.s32.totalorder %s46, %s49
      %p58 = scmp.eq.s32.totalorder %s27, 3
      %p59 = por %p57, %p58
      %p60 = scmp.ne.s32.totalorder %s49, %s50
      %p61 = scmp.eq.s32.totalorder %s27, 0
      %p62 = por %p60, %p61
      %p63 = scmp.ne.s32.totalorder %s49, %s50
      %p64 = scmp.eq.s32.totalorder %s28, 3
      %p65 = por %p63, %p64
      %p67 = scmp.ne.s32.totalorder %s50, %s66
      %p68 = scmp.eq.s32.totalorder %s28, 0
      %p69 = por %p67, %p68
      %s71 = sadd.s32 %s70, 1
      %p74 = scmp.eq.s32.totalorder %s22, 3
      %p75 = scmp.ne.s32.totalorder %s70, %s72
      %p76 = scmp.eq.s32.totalorder %s22, 0
      %p77 = por %p75, %p76
      %p78 = scmp.ne.s32.totalorder %s70, %s72
      %p79 = scmp.eq.s32.totalorder %s27, 3
      %p80 = por %p78, %p79
      %p81 = scmp.ne.s32.totalorder %s72, %s73
      %p82 = scmp.eq.s32.totalorder %s27, 0
      %p83 = por %p81, %p82
      %p84 = scmp.ne.s32.totalorder %s72, %s73
      %p85 = scmp.eq.s32.totalorder %s28, 3
      %p86 = por %p84, %p85
      %p88 = scmp.ne.s32.totalorder %s73, %s87
      %p89 = scmp.eq.s32.totalorder %s28, 0
      %p90 = por %p88, %p89
      %s92 = sadd.s32 %s91, 1
      %p95 = scmp.eq.s32.totalorder %s22, 3
      %p96 = scmp.ne.s32.totalorder %s91, %s93
      %p97 = scmp.eq.s32.totalorder %s22, 0
      %p98 = por %p96, %p97
      %p99 = scmp.ne.s32.totalorder %s91, %s93
      %p100 = scmp.eq.s32.totalorder %s27, 3
      %p101 = por %p99, %p100
      %p102 = scmp.ne.s32.totalorder %s93, %s94
      %p103 = scmp.eq.s32.totalorder %s27, 0
      %p104 = por %p102, %p103
      %p105 = scmp.ne.s32.totalorder %s93, %s94
      %p106 = scmp.eq.s32.totalorder %s28, 3
      %p107 = por %p105, %p106
      %p109 = scmp.ne.s32.totalorder %s94, %s108
      %p110 = scmp.eq.s32.totalorder %s28, 0
      %p111 = por %p109, %p110
      %s113 = sadd.s32 %s112, 1
      %p116 = scmp.eq.s32.totalorder %s22, 3
      %p117 = scmp.ne.s32.totalorder %s112, %s114
      %p118 = scmp.eq.s32.totalorder %s22, 0
      %p119 = por %p117, %p118
      %p120 = scmp.ne.s32.totalorder %s112, %s114
      %p121 = scmp.eq.s32.totalorder %s27, 3
      %p122 = por %p120, %p121
      %p123 = scmp.ne.s32.totalorder %s114, %s115
      %p124 = scmp.eq.s32.totalorder %s27, 0
      %p125 = por %p123, %p124
      %p126 = scmp.ne.s32.totalorder %s114, %s115
      %p127 = scmp.eq.s32.totalorder %s28, 3
      %p128 = por %p126, %p127
      %p130 = scmp.ne.s32.totalorder %s115, %s129
      %p131 = scmp.eq.s32.totalorder %s28, 0
      %p132 = por %p130, %p131
      %s134 = sadd.s32 %s133, 1
      %p137 = scmp.eq.s32.totalorder %s22, 3
      %p138 = scmp.ne.s32.totalorder %s133, %s135
      %p139 = scmp.eq.s32.totalorder %s22, 0
      %p140 = por %p138, %p139
      %p141 = scmp.ne.s32.totalorder %s133, %s135
      %p142 = scmp.eq.s32.totalorder %s27, 3
      %p143 = por %p141, %p142
      %p144 = scmp.ne.s32.totalorder %s135, %s136
      %p145 = scmp.eq.s32.totalorder %s27, 0
      %p146 = por %p144, %p145
      %p147 = scmp.ne.s32.totalorder %s135, %s136
      %p148 = scmp.eq.s32.totalorder %s28, 3
      %p149 = por %p147, %p148
      %p151 = scmp.ne.s32.totalorder %s136, %s150
      %p152 = scmp.eq.s32.totalorder %s28, 0
      %p153 = por %p151, %p152
      %s155 = sadd.s32 %s154, 1
      %p158 = scmp.eq.s32.totalorder %s22, 3
      %p159 = scmp.ne.s32.totalorder %s154, %s156
      %p160 = scmp.eq.s32.totalorder %s22, 0
      %p161 = por %p159, %p160
      %p162 = scmp.ne.s32.totalorder %s154, %s156
      %p163 = scmp.eq.s32.totalorder %s27, 3
      %p164 = por %p162, %p163
      %p165 = scmp.ne.s32.totalorder %s156, %s157
      %p166 = scmp.eq.s32.totalorder %s27, 0
      %p167 = por %p165, %p166
      %p168 = scmp.ne.s32.totalorder %s156, %s157
      %p169 = scmp.eq.s32.totalorder %s28, 3
      %p170 = por %p168, %p169
      %p172 = scmp.ne.s32.totalorder %s157, %s171
      %p173 = scmp.eq.s32.totalorder %s28, 0
      %p174 = por %p172, %p173
      %s176 = sadd.s32 %s175, 1
      %p179 = scmp.eq.s32.totalorder %s22, 3
      %p180 = scmp.ne.s32.totalorder %s175, %s177
      %p181 = scmp.eq.s32.totalorder %s22, 0
      %p182 = por %p180, %p181
      %p183 = scmp.ne.s32.totalorder %s175, %s177
      %p184 = scmp.eq.s32.totalorder %s27, 3
      %p185 = por %p183, %p184
      %p186 = scmp.ne.s32.totalorder %s177, %s178
      %p187 = scmp.eq.s32.totalorder %s27, 0
      %p188 = por %p186, %p187
      %p189 = scmp.ne.s32.totalorder %s177, %s178
      %p190 = scmp.eq.s32.totalorder %s28, 3
      %p191 = por %p189, %p190
      %p193 = scmp.ne.s32.totalorder %s178, %s192
      %p194 = scmp.eq.s32.totalorder %s28, 0
      %p195 = por %p193, %p194
      %s197 = sadd.s32 %s196, 1
      %p200 = scmp.eq.s32.totalorder %s22, 3
      %p201 = scmp.ne.s32.totalorder %s196, %s198
      %p202 = scmp.eq.s32.totalorder %s22, 0
      %p203 = por %p201, %p202
      %p204 = scmp.ne.s32.totalorder %s196, %s198
      %p205 = scmp.eq.s32.totalorder %s27, 3
      %p206 = por %p204, %p205
      %p207 = scmp.ne.s32.totalorder %s198, %s199
      %p208 = scmp.eq.s32.totalorder %s27, 0
      %p209 = por %p207, %p208
      %p210 = scmp.ne.s32.totalorder %s198, %s199
      %p211 = scmp.eq.s32.totalorder %s28, 3
      %p212 = por %p210, %p211
      %p214 = scmp.ne.s32.totalorder %s199, %s213
      %p215 = scmp.eq.s32.totalorder %s28, 0
      %p216 = por %p214, %p215
      %s217 = ssub.s32 %s29, %s41
      %s218 = ssub.s32 %s30, %s37
      %s219 = sor.u32 %s217, %s218
      %p220 = scmp.eq.s32.totalorder %s219, 0
      %s222 = sadd.s32 %s221, 1
      %s223 = scalar_select %p220, %s221, %s222
      %p226 = pneg %p220
      %p227 = scmp.eq.s32.totalorder %s22, 3
      %p228 = por %p226, %p227
      %p229 = scmp.ne.s32.totalorder %s221, %s224
      %p230 = scmp.eq.s32.totalorder %s22, 0
      %p231 = por %p229, %p230
      %p232 = scmp.ne.s32.totalorder %s221, %s224
      %p233 = scmp.eq.s32.totalorder %s27, 3
      %p234 = por %p232, %p233
      %p235 = scmp.ne.s32.totalorder %s224, %s225
      %p236 = scmp.eq.s32.totalorder %s27, 0
      %p237 = por %p235, %p236
      %p238 = scmp.ne.s32.totalorder %s224, %s225
      %p239 = scmp.eq.s32.totalorder %s28, 3
      %p240 = por %p238, %p239
      %p242 = scmp.ne.s32.totalorder %s225, %s241
      %p243 = scmp.eq.s32.totalorder %s28, 0
      %p244 = por %p242, %p243
      %p245 = scmp.le.s32.totalorder 1, %s22
      %p246 = scmp.lt.s32.totalorder %s22, 5
      %p247 = pnand %p245, %p246
      %p248 = pneg %p247
      // Predicated region
      $region9: #{tpu_custom_call.1} parent=5 // pred_check
        _
      $region10: #{tpu_custom_call.1} parent=5 // pred_check_branch
        %250 = sbr.rel (%p247) target = $region12
      $region11: #{tpu_custom_call.1} parent=5 // pred_region
        %s251 = ssub.s32 %s22, 1
        // Predicated region
        $region13: #{tpu_custom_call.1} parent=11 // pred_check
          %p252 = pneg %p83
        $region14: #{tpu_custom_call.1} parent=11 // pred_check_branch
          %254 = sbr.rel (%p252) target = $region16
        $region15: #{tpu_custom_call.1} parent=11 // pred_region
          %s256 = ssub.s32 512, 512
          %257 = vsyncadd [#allocation6], %s256
          %s258 = sshll.u32 [#allocation5], 4
          %s259 = int_to_ptr.vmem [resolvable:$true] %s258
          %264 = dma.hbm_to_vmem [thread:$0]  %s1, 512, %s259, [#allocation6], 64, 64, 4
        $region16: #{tpu_custom_call.1} parent=11 // pred_fallthru
          _
        // Predicated region
        $region17: #{tpu_custom_call.1} parent=11 // pred_check
          %p265 = pneg %p104
        $region18: #{tpu_custom_call.1} parent=11 // pred_check_branch
          %267 = sbr.rel (%p265) target = $region20
        $region19: #{tpu_custom_call.1} parent=11 // pred_region
          _
        $region20: #{tpu_custom_call.1} parent=11 // pred_fallthru
          _
        // Predicated region
        $region21: #{tpu_custom_call.1} parent=11 // pred_check
          %p268 = pneg %p125
        $region22: #{tpu_custom_call.1} parent=11 // pred_check_branch
          %270 = sbr.rel (%p268) target = $region24
        $region23: #{tpu_custom_call.1} parent=11 // pred_region
          _
        $region24: #{tpu_custom_call.1} parent=11 // pred_fallthru
          _
        // Predicated region
        $region25: #{tpu_custom_call.1} parent=11 // pred_check
          %p271 = pneg %p146
        $region26: #{tpu_custom_call.1} parent=11 // pred_check_branch
          %273 = sbr.rel (%p271) target = $region28
        $region27: #{tpu_custom_call.1} parent=11 // pred_region
          %s275 = ssub.s32 256, 256
          %276 = vsyncadd [#allocation6], %s275
          %s277 = sshll.u32 [#allocation7], 4
          %s278 = int_to_ptr.vmem [resolvable:$true] %s277
          %283 = dma.hbm_to_vmem [thread:$0]  %s4, 256, %s278, [#allocation6], 64, 64, 4
        $region28: #{tpu_custom_call.1} parent=11 // pred_fallthru
          _
        // Predicated region
        $region29: #{tpu_custom_call.1} parent=11 // pred_check
          %p284 = pneg %p167
        $region30: #{tpu_custom_call.1} parent=11 // pred_check_branch
          %286 = sbr.rel (%p284) target = $region32
        $region31: #{tpu_custom_call.1} parent=11 // pred_region
          _
        $region32: #{tpu_custom_call.1} parent=11 // pred_fallthru
          _
        // Predicated region
        $region33: #{tpu_custom_call.1} parent=11 // pred_check
          %p287 = pneg %p188
        $region34: #{tpu_custom_call.1} parent=11 // pred_check_branch
          %289 = sbr.rel (%p287) target = $region36
        $region35: #{tpu_custom_call.1} parent=11 // pred_region
          %s291 = ssub.s32 256, 256
          %292 = vsyncadd [#allocation9], %s291
          %s293 = sshll.u32 [#allocation8], 4
          %s294 = int_to_ptr.vmem [resolvable:$true] %s293
          %299 = dma.hbm_to_vmem [thread:$0]  %s6, 256, %s294, [#allocation9], 64, 64, 4
        $region36: #{tpu_custom_call.1} parent=11 // pred_fallthru
          _
        // Predicated region
        $region37: #{tpu_custom_call.1} parent=11 // pred_check
          %p300 = pneg %p209
        $region38: #{tpu_custom_call.1} parent=11 // pred_check_branch
          %302 = sbr.rel (%p300) target = $region40
        $region39: #{tpu_custom_call.1} parent=11 // pred_region
          _
        $region40: #{tpu_custom_call.1} parent=11 // pred_fallthru
          _
      $region12: #{tpu_custom_call.1} parent=5 // pred_fallthru
        _
      %p303 = scmp.lt.s32.totalorder %s22, 4
      // Predicated region
      $region41: #{tpu_custom_call.1} parent=5 // pred_check
        %p304 = pneg %p303
      $region42: #{tpu_custom_call.1} parent=5 // pred_check_branch
        %306 = sbr.rel (%p304) target = $region44
      $region43: #{tpu_custom_call.1} parent=5 // pred_region
        // Predicated region
        $region45: #{tpu_custom_call.1} parent=43 // pred_check
          %p307 = pneg %p56
        $region46: #{tpu_custom_call.1} parent=43 // pred_check_branch
          %309 = sbr.rel (%p307) target = $region48
        $region47: #{tpu_custom_call.1} parent=43 // pred_region
          %s310 = sand.u32 %s46, 1
          %s311 = scalar_lea.sflag [#allocation3], %s310
          %s312 = sand.u32 %s46, 1
          %s313 = smul.addr %s312, 16
          %s314 = scalar_lea.vmem [#allocation2], %s313
          %s315 = smul.u32 4, %s30
          %s317 = ssub.s32 256, 256
          %318 = vsyncadd %s311, %s317
          %s319 = smul.addr %s29, 8
          %s320 = sadd.s32 %s315, %s319
          %s321 = smul.addr %s320, 64
          %s322 = scalar_lea.hbm %s0, %s321
          %s323 = sshll.u32 %s314, 4
          %s324 = int_to_ptr.vmem [resolvable:$true] %s323
          %329 = dma.hbm_to_vmem [thread:$0]  %s322, 256, %s324, %s311, 64, 64, 4
        $region48: #{tpu_custom_call.1} parent=43 // pred_fallthru
          _
      $region44: #{tpu_custom_call.1} parent=5 // pred_fallthru
        _
      %p330 = scmp.le.s32.totalorder 1, %s22
      %p331 = scmp.lt.s32.totalorder %s22, 5
      %p332 = pnand %p330, %p331
      %p333 = pneg %p332
      // Predicated region
      $region49: #{tpu_custom_call.1} parent=5 // pred_check
        _
      $region50: #{tpu_custom_call.1} parent=5 // pred_check_branch
        %335 = sbr.rel (%p332) target = $region52
      $region51: #{tpu_custom_call.1} parent=5 // pred_region
        %s336 = ssub.s32 %s22, 1
        %s337 = sand.u32 %s49, 1
        %s338 = scalar_lea.sflag [#allocation3], %s337
        %s339 = sand.u32 %s49, 1
        %s340 = smul.addr %s339, 16
        %s341 = scalar_lea.vmem [#allocation2], %s340
        // Predicated region
        $region53: #{tpu_custom_call.1} parent=51 // pred_check
          %p342 = pneg %p62
        $region54: #{tpu_custom_call.1} parent=51 // pred_check_branch
          %344 = sbr.rel (%p342) target = $region56
        $region55: #{tpu_custom_call.1} parent=51 // pred_region
          %345 = dma.done %s338, 256
        $region56: #{tpu_custom_call.1} parent=51 // pred_fallthru
          _
        // Predicated region
        $region57: #{tpu_custom_call.1} parent=51 // pred_check
          %p346 = pneg %p83
        $region58: #{tpu_custom_call.1} parent=51 // pred_check_branch
          %348 = sbr.rel (%p346) target = $region60
        $region59: #{tpu_custom_call.1} parent=51 // pred_region
          %349 = dma.done [#allocation6], 512
        $region60: #{tpu_custom_call.1} parent=51 // pred_fallthru
          _
        // Predicated region
        $region61: #{tpu_custom_call.1} parent=51 // pred_check
          %p350 = pneg %p146
        $region62: #{tpu_custom_call.1} parent=51 // pred_check_branch
          %352 = sbr.rel (%p350) target = $region64
        $region63: #{tpu_custom_call.1} parent=51 // pred_region
          %353 = dma.done [#allocation6], 256
        $region64: #{tpu_custom_call.1} parent=51 // pred_fallthru
          _
        // Predicated region
        $region65: #{tpu_custom_call.1} parent=51 // pred_check
          %p354 = pneg %p188
        $region66: #{tpu_custom_call.1} parent=51 // pred_check_branch
          %356 = sbr.rel (%p354) target = $region68
        $region67: #{tpu_custom_call.1} parent=51 // pred_region
          %357 = dma.done [#allocation9], 256
        $region68: #{tpu_custom_call.1} parent=51 // pred_fallthru
          _
        %s358 = sand.u32 %s49, 1
        %s359 = scalar_lea.sflag [#allocation3], %s358
        %s360 = sand.u32 %s49, 1
        %s361 = smul.addr %s360, 16
        %s362 = scalar_lea.vmem [#allocation2], %s361
        %p363 = pneg %p62
        %p364 = pneg %p59
        %p365 = pneg %p83
        %p366 = pneg %p80
        %p367 = pneg %p104
        %p368 = pneg %p101
        %p369 = pneg %p125
        %p370 = pneg %p122
        %p371 = pneg %p146
        %p372 = pneg %p143
        %p373 = pneg %p167
        %p374 = pneg %p164
        %p375 = pneg %p188
        %p376 = pneg %p185
        %p377 = pneg %p209
        %p378 = pneg %p206
        %p379 = pneg %p237
        %p380 = pneg %p234
        %s381 = sand.u32 %s224, 1
        %s382 = scalar_lea.sflag [#allocation4], %s381
        %s383 = sand.u32 %s224, 1
        %s384 = smul.addr %s383, 16
        %s385 = scalar_lea.vmem [#allocation10], %s384
        %s386 = smul.u32 4, %s32
        %s387 = smul.u32 4, %s32
        %v389 = vld [vmem:[%s341] sm:$0xf]
        %v390 = vld [vmem:[%s341 + $0x4] sm:$0xf]
        %v391 = vld [vmem:[%s341 + $0x8] sm:$0xf]
        %v392 = vld [vmem:[%s341 + $0xc] sm:$0xf]
        %v393 = vunpack.c.l.bf16 %v389
        %v394 = vunpack.c.l.bf16 %v390
        %v395 = vunpack.c.l.bf16 %v391
        %v396 = vunpack.c.l.bf16 %v392
        %v401 = vcombine.high %v393, %v393
        %v402 = vcombine.high %v394, %v394
        %v403 = vcombine.high %v395, %v395
        %v404 = vcombine.high %v396, %v396
        %v409 = vcombine.low %v393, %v394
        %v410 = vcombine.low %v395, %v396
        %v411 = vcombine.low %v401, %v402
        %v412 = vcombine.low %v403, %v404
        %vm417 = vcmask 261120
        %v418 = vsel %vm417, %v409, 0.0
        %419 = vadd.xlane.f32.xlu0 %v418
        %v420 = vpop.xlane.xlu0 %419
        %v421 = vsel %vm417, %v410, 0.0
        %422 = vadd.xlane.f32.xlu0 %v421
        %v423 = vpop.xlane.xlu0 %422
        %v424 = vsel %vm417, %v411, 0.0
        %425 = vadd.xlane.f32.xlu0 %v424
        %v426 = vpop.xlane.xlu0 %425
        %v427 = vsel %vm417, %v412, 0.0
        %428 = vadd.xlane.f32.xlu0 %v427
        %v429 = vpop.xlane.xlu0 %428
        %v430 = vrcp.pop 32.0
        %v431 = vmul.f32 %v420, %v430
        %v432 = vmul.f32 %v423, %v430
        %v433 = vmul.f32 %v426, %v430
        %v434 = vmul.f32 %v429, %v430
        %v440 = vunpack.c.l.s4 839922192
        %v441 = vunpack.c.0.s8 %v440
        %v442 = vlaneseq
        %v443 = vshrl.u32 %v442, 7
        %v444 = vsub.s32 %v441, %v443
        %v445 = vrot.slane %v431, %v444
        %v447 = vunpack.c.l.s4 1985246804
        %v448 = vunpack.c.0.s8 %v447
        %v449 = vlaneseq
        %v450 = vshrl.u32 %v449, 7
        %v451 = vsub.s32 %v448, %v450
        %v452 = vrot.slane %v431, %v451
        %v454 = vunpack.c.l.s4 839922192
        %v455 = vunpack.c.0.s8 %v454
        %v456 = vlaneseq
        %v457 = vshrl.u32 %v456, 7
        %v458 = vsub.s32 %v455, %v457
        %v459 = vrot.slane %v432, %v458
        %v461 = vunpack.c.l.s4 1985246804
        %v462 = vunpack.c.0.s8 %v461
        %v463 = vlaneseq
        %v464 = vshrl.u32 %v463, 7
        %v465 = vsub.s32 %v462, %v464
        %v466 = vrot.slane %v432, %v465
        %v468 = vunpack.c.l.s4 839922192
        %v469 = vunpack.c.0.s8 %v468
        %v470 = vlaneseq
        %v471 = vshrl.u32 %v470, 7
        %v472 = vsub.s32 %v469, %v471
        %v473 = vrot.slane %v433, %v472
        %v475 = vunpack.c.l.s4 1985246804
        %v476 = vunpack.c.0.s8 %v475
        %v477 = vlaneseq
        %v478 = vshrl.u32 %v477, 7
        %v479 = vsub.s32 %v476, %v478
        %v480 = vrot.slane %v433, %v479
        %v482 = vunpack.c.l.s4 839922192
        %v483 = vunpack.c.0.s8 %v482
        %v484 = vlaneseq
        %v485 = vshrl.u32 %v484, 7
        %v486 = vsub.s32 %v483, %v485
        %v487 = vrot.slane %v434, %v486
        %v489 = vunpack.c.l.s4 1985246804
        %v490 = vunpack.c.0.s8 %v489
        %v491 = vlaneseq
        %v492 = vshrl.u32 %v491, 7
        %v493 = vsub.s32 %v490, %v492
        %v494 = vrot.slane %v434, %v493
        %v503 = vsub.f32 %v393, %v445
        %v504 = vsub.f32 %v394, %v452
        %v505 = vsub.f32 %v395, %v459
        %v506 = vsub.f32 %v396, %v466
        %v507 = vsub.f32 %v401, %v473
        %v508 = vsub.f32 %v402, %v480
        %v509 = vsub.f32 %v403, %v487
        %v510 = vsub.f32 %v404, %v494
        %v511 = vmul.f32 %v503, %v503
        %v512 = vmul.f32 %v504, %v504
        %v513 = vmul.f32 %v505, %v505
        %v514 = vmul.f32 %v506, %v506
        %v515 = vmul.f32 %v507, %v507
        %v516 = vmul.f32 %v508, %v508
        %v517 = vmul.f32 %v509, %v509
        %v518 = vmul.f32 %v510, %v510
        %v527 = vcombine.low %v511, %v512
        %v528 = vcombine.low %v513, %v514
        %v529 = vcombine.low %v515, %v516
        %v530 = vcombine.low %v517, %v518
        %v535 = vsel %vm417, %v527, 0.0
        %536 = vadd.xlane.f32.xlu0 %v535
        %v537 = vpop.xlane.xlu0 %536
        %v538 = vsel %vm417, %v528, 0.0
        %539 = vadd.xlane.f32.xlu0 %v538
        %v540 = vpop.xlane.xlu0 %539
        %v541 = vsel %vm417, %v529, 0.0
        %542 = vadd.xlane.f32.xlu0 %v541
        %v543 = vpop.xlane.xlu0 %542
        %v544 = vsel %vm417, %v530, 0.0
        %545 = vadd.xlane.f32.xlu0 %v544
        %v546 = vpop.xlane.xlu0 %545
        %v547 = vmul.f32 %v537, %v430
        %v548 = vmul.f32 %v540, %v430
        %v549 = vmul.f32 %v543, %v430
        %v550 = vmul.f32 %v546, %v430
        %v551 = vadd.f32 %v547, 1e-05
        %v552 = vadd.f32 %v548, 1e-05
        %v553 = vadd.f32 %v549, 1e-05
        %v554 = vadd.f32 %v550, 1e-05
        %v555 = vrsqrt.pop %v551
        %v556 = vrsqrt.pop %v552
        %v557 = vrsqrt.pop %v553
        %v558 = vrsqrt.pop %v554
        %v564 = vunpack.c.l.s4 839922192
        %v565 = vunpack.c.0.s8 %v564
        %v566 = vlaneseq
        %v567 = vshrl.u32 %v566, 7
        %v568 = vsub.s32 %v565, %v567
        %v569 = vrot.slane %v555, %v568
        %v571 = vunpack.c.l.s4 1985246804
        %v572 = vunpack.c.0.s8 %v571
        %v573 = vlaneseq
        %v574 = vshrl.u32 %v573, 7
        %v575 = vsub.s32 %v572, %v574
        %v576 = vrot.slane %v555, %v575
        %v578 = vunpack.c.l.s4 839922192
        %v579 = vunpack.c.0.s8 %v578
        %v580 = vlaneseq
        %v581 = vshrl.u32 %v580, 7
        %v582 = vsub.s32 %v579, %v581
        %v583 = vrot.slane %v556, %v582
        %v585 = vunpack.c.l.s4 1985246804
        %v586 = vunpack.c.0.s8 %v585
        %v587 = vlaneseq
        %v588 = vshrl.u32 %v587, 7
        %v589 = vsub.s32 %v586, %v588
        %v590 = vrot.slane %v556, %v589
        %v592 = vunpack.c.l.s4 839922192
        %v593 = vunpack.c.0.s8 %v592
        %v594 = vlaneseq
        %v595 = vshrl.u32 %v594, 7
        %v596 = vsub.s32 %v593, %v595
        %v597 = vrot.slane %v557, %v596
        %v599 = vunpack.c.l.s4 1985246804
        %v600 = vunpack.c.0.s8 %v599
        %v601 = vlaneseq
        %v602 = vshrl.u32 %v601, 7
        %v603 = vsub.s32 %v600, %v602
        %v604 = vrot.slane %v557, %v603
        %v606 = vunpack.c.l.s4 839922192
        %v607 = vunpack.c.0.s8 %v606
        %v608 = vlaneseq
        %v609 = vshrl.u32 %v608, 7
        %v610 = vsub.s32 %v607, %v609
        %v611 = vrot.slane %v558, %v610
        %v613 = vunpack.c.l.s4 1985246804
        %v614 = vunpack.c.0.s8 %v613
        %v615 = vlaneseq
        %v616 = vshrl.u32 %v615, 7
        %v617 = vsub.s32 %v614, %v616
        %v618 = vrot.slane %v558, %v617
        %v627 = vmul.f32 %v503, %v569
        %v628 = vmul.f32 %v504, %v576
        %v629 = vmul.f32 %v505, %v583
        %v630 = vmul.f32 %v506, %v590
        %v631 = vmul.f32 %v507, %v597
        %v632 = vmul.f32 %v508, %v604
        %v633 = vmul.f32 %v509, %v611
        %v634 = vmul.f32 %v510, %v618
        %v635 = vld [vmem:[%s2] sm:$0x1]
        %v637 = vlaneseq
        %v638 = vshrl.u32 %v637, 7
        %v639 = vsub.s32 0, %v638
        %v640 = vrot.slane %v635, %v639
        %v642 = vcombine.high %v640, %v640
        %v644 = vmul.f32 %v627, %v640
        %v645 = vmul.f32 %v628, %v642
        %v646 = vmul.f32 %v629, %v640
        %v647 = vmul.f32 %v630, %v642
        %v648 = vmul.f32 %v631, %v640
        %v649 = vmul.f32 %v632, %v642
        %v650 = vmul.f32 %v633, %v640
        %v651 = vmul.f32 %v634, %v642
        %v652 = vld [vmem:[%s3] sm:$0x1]
        %v654 = vlaneseq
        %v655 = vshrl.u32 %v654, 7
        %v656 = vsub.s32 0, %v655
        %v657 = vrot.slane %v652, %v656
        %v659 = vcombine.high %v657, %v657
        %v661 = vadd.f32 %v644, %v657
        %v662 = vadd.f32 %v645, %v659
        %v663 = vadd.f32 %v646, %v657
        %v664 = vadd.f32 %v647, %v659
        %v665 = vadd.f32 %v648, %v657
        %v666 = vadd.f32 %v649, %v659
        %v667 = vadd.f32 %v650, %v657
        %v668 = vadd.f32 %v651, %v659
        %v677 = vcombine.low %v661, %v662
        %v678 = vcombine.low %v663, %v664
        %v679 = vcombine.low %v665, %v666
        %v680 = vcombine.low %v667, %v668
        %v685 = vpack.c.bf16 %v678, %v677
        %v686 = vpack.c.bf16 %v680, %v679
        %v687 = vld [vmem:[#allocation7] sm:$0xf]
        %v688 = vld [vmem:[#allocation7 + $0x4] sm:$0xf]
        %v689 = vld [vmem:[#allocation7 + $0x8] sm:$0xf]
        %v690 = vld [vmem:[#allocation7 + $0xc] sm:$0xf]
        %v691 = vld [vmem:[%s5] sm:$0x1]
        %v693 = vlaneseq
        %v694 = vshrl.u32 %v693, 7
        %v695 = vsub.s32 0, %v694
        %v696 = vrot.slane %v691, %v695
        %v702 = vunpack.c.l.b16 %v687
        %v703 = vunpack.c.l.b16 %v688
        %v704 = vunpack.c.l.b16 %v689
        %v705 = vunpack.c.l.b16 %v690
        %v706 = vpack.c.b16 %v703, %v702
        %v707 = vpack.c.b16 %v705, %v704
        %v711 = vsel %vm417, %v685, 0
        %v714 = vsel %vm417, %v686, 0
        %716 = vmatprep.subr.bf16.mxu0 0
        %717 = vmatpush1.bf16.msra.mxu0 0
        %718 = vmatprep.subr.bf16.mxu0 0
        %719 = vmatpush1.bf16.msra.mxu0 0
        %720 = vmatprep.subr.bf16.mxu0 0
        %721 = vmatpush1.bf16.msra.mxu0 0
        %722 = vmatprep.subr.bf16.mxu0 0
        %723 = vmatpush1.bf16.msra.mxu0 0
        %724 = vmatprep.subr.bf16.mxu0 0
        %725 = vmatpush1.bf16.msra.mxu0 0
        %726 = vmatprep.subr.bf16.mxu0 0
        %727 = vmatpush1.bf16.msra.mxu0 0
        %728 = vmatprep.subr.bf16.mxu0 0
        %729 = vmatpush1.bf16.msra.mxu0 %v707
        %730 = vmatprep.subr.bf16.mxu0 0
        %731 = vmatpush1.bf16.msra.mxu0 %v706
        %732 = vmatprep.subr.bf16.mxu0 0
        %733 = vmatpush2.bf16.msra.mxu0 0
        %734 = vmatprep.subr.bf16.mxu0 0
        %735 = vmatpush2.bf16.msra.mxu0 0
        %736 = vmatprep.subr.bf16.mxu0 0
        %737 = vmatpush2.bf16.msra.mxu0 0
        %738 = vmatprep.subr.bf16.mxu0 0
        %739 = vmatpush2.bf16.msra.mxu0 0
        %740 = vmatprep.subr.bf16.mxu0 0
        %741 = vmatpush2.bf16.msra.mxu0 0
        %742 = vmatprep.subr.bf16.mxu0 0
        %743 = vmatpush2.bf16.msra.mxu0 0
        %744 = vmatprep.subr.bf16.mxu0 0
        %745 = vmatpush2.bf16.msra.mxu0 0
        %746 = vmatprep.subr.bf16.mxu0 0
        %747 = vmatpush2.bf16.msra.mxu0 0
        %748 = vmatprep.mubr.bf16.mxu0 0
        %749 = vmatmul.mubr.bf16.gmra.mxu0 %v711
        %v750 = vpop.f32.mrf.mxu0
        %v751 = vadd.f32 %v696, %v750
        %v752 = vpop.f32.mrf.mxu0
        %v753 = vpop.f32.mrf.mxu0
        %v754 = vadd.f32 %v696, %v753
        %v755 = vpop.f32.mrf.mxu0
        %756 = vmatprep.mubr.bf16.mxu0 0
        %757 = vmatmul.mubr.bf16.gmra.mxu0 %v714
        %v758 = vpop.f32.mrf.mxu0
        %v759 = vadd.f32 %v696, %v758
        %v760 = vpop.f32.mrf.mxu0
        %v761 = vpop.f32.mrf.mxu0
        %v762 = vadd.f32 %v696, %v761
        %v763 = vpop.f32.mrf.mxu0
        %764 = vdwg.mxu0
        %v765 = vld [vmem:[#allocation5] sm:$0xf]
        %v766 = vld [vmem:[#allocation5 + $0x4] sm:$0xf]
        %v767 = vld [vmem:[#allocation5 + $0x8] sm:$0xf]
        %v768 = vld [vmem:[#allocation5 + $0xc] sm:$0xf]
        %v769 = vld [vmem:[#allocation5 + $0x10] sm:$0xf]
        %v770 = vld [vmem:[#allocation5 + $0x14] sm:$0xf]
        %v771 = vld [vmem:[#allocation5 + $0x18] sm:$0xf]
        %v772 = vld [vmem:[#allocation5 + $0x1c] sm:$0xf]
        %v773 = vunpack.c.l.bf16 %v765
        %v774 = vunpack.c.l.bf16 %v766
        %v775 = vunpack.c.l.bf16 %v767
        %v776 = vunpack.c.l.bf16 %v768
        %v777 = vunpack.c.l.bf16 %v769
        %v778 = vunpack.c.l.bf16 %v770
        %v779 = vunpack.c.l.bf16 %v771
        %v780 = vunpack.c.l.bf16 %v772
        %v781 = vpack.c.bf16 %v754, %v751
        %v782 = vpack.c.bf16 %v762, %v759
        %784 = vrot.lane.b32.xlu0 %v781, 96
        %v785 = vpop.permute.xlu0 %784
        %vm786 = vcmask 64512
        %v788 = vsel %vm786, %v781, 0
        %v791 = vsel %vm786, %v785, 0
        %793 = vmatprep.subr.bf16.mxu0 0
        %794 = vmatpush1.bf16.xpose.msra.mxu0 0
        %795 = vmatprep.subr.bf16.mxu0 0
        %796 = vmatpush1.bf16.xpose.msra.mxu0 0
        %797 = vmatprep.subr.bf16.mxu0 0
        %798 = vmatpush1.bf16.xpose.msra.mxu0 0
        %799 = vmatprep.subr.bf16.mxu0 0
        %800 = vmatpush1.bf16.xpose.msra.mxu0 0
        %801 = vmatprep.subr.bf16.mxu0 0
        %802 = vmatpush1.bf16.xpose.msra.mxu0 0
        %803 = vmatprep.subr.bf16.mxu0 0
        %804 = vmatpush1.bf16.xpose.msra.mxu0 0
        %805 = vmatprep.subr.bf16.mxu0 0
        %806 = vmatpush1.bf16.xpose.msra.mxu0 0
        %807 = vmatprep.subr.bf16.mxu0 0
        %808 = vmatpush1.bf16.xpose.msra.mxu0 %v791
        %809 = vmatprep.subr.bf16.mxu0 0
        %810 = vmatpush2.bf16.xpose.msra.mxu0 0
        %811 = vmatprep.subr.bf16.mxu0 0
        %812 = vmatpush2.bf16.xpose.msra.mxu0 0
        %813 = vmatprep.subr.bf16.mxu0 0
        %814 = vmatpush2.bf16.xpose.msra.mxu0 0
        %815 = vmatprep.subr.bf16.mxu0 0
        %816 = vmatpush2.bf16.xpose.msra.mxu0 0
        %817 = vmatprep.subr.bf16.mxu0 0
        %818 = vmatpush2.bf16.xpose.msra.mxu0 0
        %819 = vmatprep.subr.bf16.mxu0 0
        %820 = vmatpush2.bf16.xpose.msra.mxu0 0
        %821 = vmatprep.subr.bf16.mxu0 0
        %822 = vmatpush2.bf16.xpose.msra.mxu0 0
        %823 = vmatprep.subr.bf16.mxu0 0
        %824 = vmatpush2.bf16.xpose.msra.mxu0 0
        %825 = vmatprep.mubr.bf16.mxu0 0
        %826 = vmatmul.mubr.bf16.gmra.mxu0 %v788
        %v827 = vpop.f32.mrf.mxu0
        %v828 = vadd.f32 %v773, %v827
        %v829 = vpop.f32.mrf.mxu0
        %v830 = vpop.f32.mrf.mxu0
        %v831 = vadd.f32 %v774, %v830
        %v832 = vpop.f32.mrf.mxu0
        %833 = vdwg.mxu0
        %835 = vrot.lane.b32.xlu0 %v782, 96
        %v836 = vpop.permute.xlu0 %835
        %v838 = vsel %vm786, %v782, 0
        %v841 = vsel %vm786, %v836, 0
        %843 = vmatprep.subr.bf16.mxu0 0
        %844 = vmatpush1.bf16.xpose.msra.mxu0 0
        %845 = vmatprep.subr.bf16.mxu0 0
        %846 = vmatpush1.bf16.xpose.msra.mxu0 0
        %847 = vmatprep.subr.bf16.mxu0 0
        %848 = vmatpush1.bf16.xpose.msra.mxu0 0
        %849 = vmatprep.subr.bf16.mxu0 0
        %850 = vmatpush1.bf16.xpose.msra.mxu0 0
        %851 = vmatprep.subr.bf16.mxu0 0
        %852 = vmatpush1.bf16.xpose.msra.mxu0 0
        %853 = vmatprep.subr.bf16.mxu0 0
        %854 = vmatpush1.bf16.xpose.msra.mxu0 0
        %855 = vmatprep.subr.bf16.mxu0 0
        %856 = vmatpush1.bf16.xpose.msra.mxu0 0
        %857 = vmatprep.subr.bf16.mxu0 0
        %858 = vmatpush1.bf16.xpose.msra.mxu0 %v841
        %859 = vmatprep.subr.bf16.mxu0 0
        %860 = vmatpush2.bf16.xpose.msra.mxu0 0
        %861 = vmatprep.subr.bf16.mxu0 0
        %862 = vmatpush2.bf16.xpose.msra.mxu0 0
        %863 = vmatprep.subr.bf16.mxu0 0
        %864 = vmatpush2.bf16.xpose.msra.mxu0 0
        %865 = vmatprep.subr.bf16.mxu0 0
        %866 = vmatpush2.bf16.xpose.msra.mxu0 0
        %867 = vmatprep.subr.bf16.mxu0 0
        %868 = vmatpush2.bf16.xpose.msra.mxu0 0
        %869 = vmatprep.subr.bf16.mxu0 0
        %870 = vmatpush2.bf16.xpose.msra.mxu0 0
        %871 = vmatprep.subr.bf16.mxu0 0
        %872 = vmatpush2.bf16.xpose.msra.mxu0 0
        %873 = vmatprep.subr.bf16.mxu0 0
        %874 = vmatpush2.bf16.xpose.msra.mxu0 0
        %875 = vmatprep.mubr.bf16.mxu0 0
        %876 = vmatmul.mubr.bf16.gmra.mxu0 %v838
        %v877 = vpop.f32.mrf.mxu0
        %v878 = vadd.f32 %v773, %v877
        %v879 = vpop.f32.mrf.mxu0
        %v880 = vpop.f32.mrf.mxu0
        %v881 = vadd.f32 %v774, %v880
        %v882 = vpop.f32.mrf.mxu0
        %883 = vdwg.mxu0
        %vm884 = vcmask 130048
        %v885 = vsel %vm884, %v828, -inf
        %886 = vmax.xlane.f32.xlu0 %v885
        %v887 = vpop.xlane.xlu0 %886
        %v888 = vsel %vm884, %v831, -inf
        %889 = vmax.xlane.f32.xlu0 %v888
        %v890 = vpop.xlane.xlu0 %889
        %v891 = vsel %vm884, %v878, -inf
        %892 = vmax.xlane.f32.xlu0 %v891
        %v893 = vpop.xlane.xlu0 %892
        %v894 = vsel %vm884, %v881, -inf
        %895 = vmax.xlane.f32.xlu0 %v894
        %v896 = vpop.xlane.xlu0 %895
        %v897 = vsub.f32 %v828, %v887
        %v898 = vsub.f32 %v831, %v890
        %v899 = vsub.f32 %v878, %v893
        %v900 = vsub.f32 %v881, %v896
        %v901 = vmul.f32 %v897, 1.442695
        %v902 = vpow.pop %v901
        %v903 = vmul.f32 %v898, 1.442695
        %v904 = vpow.pop %v903
        %v905 = vmul.f32 %v899, 1.442695
        %v906 = vpow.pop %v905
        %v907 = vmul.f32 %v900, 1.442695
        %v908 = vpow.pop %v907
        %v909 = vsel %vm884, %v902, 0.0
        %910 = vadd.xlane.f32.xlu0 %v909
        %v911 = vpop.xlane.xlu0 %910
        %v912 = vsel %vm884, %v904, 0.0
        %913 = vadd.xlane.f32.xlu0 %v912
        %v914 = vpop.xlane.xlu0 %913
        %v915 = vsel %vm884, %v906, 0.0
        %916 = vadd.xlane.f32.xlu0 %v915
        %v917 = vpop.xlane.xlu0 %916
        %v918 = vsel %vm884, %v908, 0.0
        %919 = vadd.xlane.f32.xlu0 %v918
        %v920 = vpop.xlane.xlu0 %919
        %v921 = vrcp.pop %v911
        %v922 = vrcp.pop %v914
        %v923 = vrcp.pop %v917
        %v924 = vrcp.pop %v920
        %v925 = vmul.f32 %v902, %v921
        %v926 = vmul.f32 %v904, %v922
        %v927 = vmul.f32 %v906, %v923
        %v928 = vmul.f32 %v908, %v924
        %v929 = vpack.c.bf16 %v926, %v925
        %v930 = vpack.c.bf16 %v928, %v927
        %931 = vrot.lane.b32.xlu0 %v781, 64
        %v932 = vpop.permute.xlu0 %931
        %v935 = vsel %vm884, %v929, 0
        %937 = vmatprep.subr.bf16.mxu0 0
        %938 = vmatpush1.bf16.msra.mxu0 0
        %939 = vmatprep.subr.bf16.mxu0 0
        %940 = vmatpush1.bf16.msra.mxu0 0
        %941 = vmatprep.subr.bf16.mxu0 0
        %942 = vmatpush1.bf16.msra.mxu0 0
        %943 = vmatprep.subr.bf16.mxu0 0
        %944 = vmatpush1.bf16.msra.mxu0 0
        %945 = vmatprep.subr.bf16.mxu0 0
        %946 = vmatpush1.bf16.msra.mxu0 0
        %947 = vmatprep.subr.bf16.mxu0 0
        %948 = vmatpush1.bf16.msra.mxu0 0
        %949 = vmatprep.subr.bf16.mxu0 0
        %950 = vmatpush1.bf16.msra.mxu0 0
        %951 = vmatprep.subr.bf16.mxu0 0
        %952 = vmatpush1.bf16.msra.mxu0 %v932
        %953 = vmatprep.subr.bf16.mxu0 0
        %954 = vmatpush2.bf16.msra.mxu0 0
        %955 = vmatprep.subr.bf16.mxu0 0
        %956 = vmatpush2.bf16.msra.mxu0 0
        %957 = vmatprep.subr.bf16.mxu0 0
        %958 = vmatpush2.bf16.msra.mxu0 0
        %959 = vmatprep.subr.bf16.mxu0 0
        %960 = vmatpush2.bf16.msra.mxu0 0
        %961 = vmatprep.subr.bf16.mxu0 0
        %962 = vmatpush2.bf16.msra.mxu0 0
        %963 = vmatprep.subr.bf16.mxu0 0
        %964 = vmatpush2.bf16.msra.mxu0 0
        %965 = vmatprep.subr.bf16.mxu0 0
        %966 = vmatpush2.bf16.msra.mxu0 0
        %967 = vmatprep.subr.bf16.mxu0 0
        %968 = vmatpush2.bf16.msra.mxu0 0
        %969 = vmatprep.mubr.bf16.mxu0 0
        %970 = vmatmul.mubr.bf16.gmra.mxu0 %v935
        %v971 = vpop.f32.mrf.mxu0
        %v972 = vadd.f32 0.0, %v971
        %v973 = vpop.f32.mrf.mxu0
        %v974 = vpop.f32.mrf.mxu0
        %v975 = vadd.f32 0.0, %v974
        %v976 = vpop.f32.mrf.mxu0
        %977 = vdwg.mxu0
        %978 = vrot.lane.b32.xlu0 %v782, 64
        %v979 = vpop.permute.xlu0 %978
        %v982 = vsel %vm884, %v930, 0
        %984 = vmatprep.subr.bf16.mxu0 0
        %985 = vmatpush1.bf16.msra.mxu0 0
        %986 = vmatprep.subr.bf16.mxu0 0
        %987 = vmatpush1.bf16.msra.mxu0 0
        %988 = vmatprep.subr.bf16.mxu0 0
        %989 = vmatpush1.bf16.msra.mxu0 0
        %990 = vmatprep.subr.bf16.mxu0 0
        %991 = vmatpush1.bf16.msra.mxu0 0
        %992 = vmatprep.subr.bf16.mxu0 0
        %993 = vmatpush1.bf16.msra.mxu0 0
        %994 = vmatprep.subr.bf16.mxu0 0
        %995 = vmatpush1.bf16.msra.mxu0 0
        %996 = vmatprep.subr.bf16.mxu0 0
        %997 = vmatpush1.bf16.msra.mxu0 0
        %998 = vmatprep.subr.bf16.mxu0 0
        %999 = vmatpush1.bf16.msra.mxu0 %v979
        %1000 = vmatprep.subr.bf16.mxu0 0
        %1001 = vmatpush2.bf16.msra.mxu0 0
        %1002 = vmatprep.subr.bf16.mxu0 0
        %1003 = vmatpush2.bf16.msra.mxu0 0
        %1004 = vmatprep.subr.bf16.mxu0 0
        %1005 = vmatpush2.bf16.msra.mxu0 0
        %1006 = vmatprep.subr.bf16.mxu0 0
        %1007 = vmatpush2.bf16.msra.mxu0 0
        %1008 = vmatprep.subr.bf16.mxu0 0
        %1009 = vmatpush2.bf16.msra.mxu0 0
        %1010 = vmatprep.subr.bf16.mxu0 0
        %1011 = vmatpush2.bf16.msra.mxu0 0
        %1012 = vmatprep.subr.bf16.mxu0 0
        %1013 = vmatpush2.bf16.msra.mxu0 0
        %1014 = vmatprep.subr.bf16.mxu0 0
        %1015 = vmatpush2.bf16.msra.mxu0 0
        %1016 = vmatprep.mubr.bf16.mxu0 0
        %1017 = vmatmul.mubr.bf16.gmra.mxu0 %v982
        %v1018 = vpop.f32.mrf.mxu0
        %v1019 = vadd.f32 0.0, %v1018
        %v1020 = vpop.f32.mrf.mxu0
        %v1021 = vpop.f32.mrf.mxu0
        %v1022 = vadd.f32 0.0, %v1021
        %v1023 = vpop.f32.mrf.mxu0
        %1024 = vdwg.mxu0
        %v1025 = vpack.c.bf16 %v975, %v972
        %v1026 = vpack.c.bf16 %v1022, %v1019
        %v1027 = vld [vmem:[#allocation8] sm:$0xf]
        %1028 = vrot.lane.b32.xlu0 %v781, 120
        %v1029 = vpop.permute.xlu0 %1028
        %1030 = vrot.lane.b32.xlu0 %v781, 88
        %v1031 = vpop.permute.xlu0 %1030
        %v1033 = vsel %vm786, %v1029, 0
        %v1036 = vsel %vm786, %v1031, 0
        %1038 = vmatprep.subr.bf16.mxu0 0
        %1039 = vmatpush1.bf16.xpose.msra.mxu0 0
        %1040 = vmatprep.subr.bf16.mxu0 0
        %1041 = vmatpush1.bf16.xpose.msra.mxu0 0
        %1042 = vmatprep.subr.bf16.mxu0 0
        %1043 = vmatpush1.bf16.xpose.msra.mxu0 0
        %1044 = vmatprep.subr.bf16.mxu0 0
        %1045 = vmatpush1.bf16.xpose.msra.mxu0 0
        %1046 = vmatprep.subr.bf16.mxu0 0
        %1047 = vmatpush1.bf16.xpose.msra.mxu0 0
        %1048 = vmatprep.subr.bf16.mxu0 0
        %1049 = vmatpush1.bf16.xpose.msra.mxu0 0
        %1050 = vmatprep.subr.bf16.mxu0 0
        %1051 = vmatpush1.bf16.xpose.msra.mxu0 0
        %1052 = vmatprep.subr.bf16.mxu0 0
        %1053 = vmatpush1.bf16.xpose.msra.mxu0 %v1036
        %1054 = vmatprep.subr.bf16.mxu0 0
        %1055 = vmatpush2.bf16.xpose.msra.mxu0 0
        %1056 = vmatprep.subr.bf16.mxu0 0
        %1057 = vmatpush2.bf16.xpose.msra.mxu0 0
        %1058 = vmatprep.subr.bf16.mxu0 0
        %1059 = vmatpush2.bf16.xpose.msra.mxu0 0
        %1060 = vmatprep.subr.bf16.mxu0 0
        %1061 = vmatpush2.bf16.xpose.msra.mxu0 0
        %1062 = vmatprep.subr.bf16.mxu0 0
        %1063 = vmatpush2.bf16.xpose.msra.mxu0 0
        %1064 = vmatprep.subr.bf16.mxu0 0
        %1065 = vmatpush2.bf16.xpose.msra.mxu0 0
        %1066 = vmatprep.subr.bf16.mxu0 0
        %1067 = vmatpush2.bf16.xpose.msra.mxu0 0
        %1068 = vmatprep.subr.bf16.mxu0 0
        %1069 = vmatpush2.bf16.xpose.msra.mxu0 0
        %1070 = vmatprep.mubr.bf16.mxu0 0
        %1071 = vmatmul.mubr.bf16.gmra.mxu0 %v1033
        %v1072 = vpop.f32.mrf.mxu0
        %v1073 = vadd.f32 %v775, %v1072
        %v1074 = vpop.f32.mrf.mxu0
        %v1075 = vpop.f32.mrf.mxu0
        %v1076 = vadd.f32 %v776, %v1075
        %v1077 = vpop.f32.mrf.mxu0
        %1078 = vdwg.mxu0
        %1079 = vrot.lane.b32.xlu0 %v782, 120
        %v1080 = vpop.permute.xlu0 %1079
        %1081 = vrot.lane.b32.xlu0 %v782, 88
        %v1082 = vpop.permute.xlu0 %1081
        %v1084 = vsel %vm786, %v1080, 0
        %v1087 = vsel %vm786, %v1082, 0
        %1089 = vmatprep.subr.bf16.mxu0 0
        %1090 = vmatpush1.bf16.xpose.msra.mxu0 0
        %1091 = vmatprep.subr.bf16.mxu0 0
        %1092 = vmatpush1.bf16.xpose.msra.mxu0 0
        %1093 = vmatprep.subr.bf16.mxu0 0
        %1094 = vmatpush1.bf16.xpose.msra.mxu0 0
        %1095 = vmatprep.subr.bf16.mxu0 0
        %1096 = vmatpush1.bf16.xpose.msra.mxu0 0
        %1097 = vmatprep.subr.bf16.mxu0 0
        %1098 = vmatpush1.bf16.xpose.msra.mxu0 0
        %1099 = vmatprep.subr.bf16.mxu0 0
        %1100 = vmatpush1.bf16.xpose.msra.mxu0 0
        %1101 = vmatprep.subr.bf16.mxu0 0
        %1102 = vmatpush1.bf16.xpose.msra.mxu0 0
        %1103 = vmatprep.subr.bf16.mxu0 0
        %1104 = vmatpush1.bf16.xpose.msra.mxu0 %v1087
        %1105 = vmatprep.subr.bf16.mxu0 0
        %1106 = vmatpush2.bf16.xpose.msra.mxu0 0
        %1107 = vmatprep.subr.bf16.mxu0 0
        %1108 = vmatpush2.bf16.xpose.msra.mxu0 0
        %1109 = vmatprep.subr.bf16.mxu0 0
        %1110 = vmatpush2.bf16.xpose.msra.mxu0 0
        %1111 = vmatprep.subr.bf16.mxu0 0
        %1112 = vmatpush2.bf16.xpose.msra.mxu0 0
        %1113 = vmatprep.subr.bf16.mxu0 0
        %1114 = vmatpush2.bf16.xpose.msra.mxu0 0
        %1115 = vmatprep.subr.bf16.mxu0 0
        %1116 = vmatpush2.bf16.xpose.msra.mxu0 0
        %1117 = vmatprep.subr.bf16.mxu0 0
        %1118 = vmatpush2.bf16.xpose.msra.mxu0 0
        %1119 = vmatprep.subr.bf16.mxu0 0
        %1120 = vmatpush2.bf16.xpose.msra.mxu0 0
        %1121 = vmatprep.mubr.bf16.mxu0 0
        %1122 = vmatmul.mubr.bf16.gmra.mxu0 %v1084
        %v1123 = vpop.f32.mrf.mxu0
        %v1124 = vadd.f32 %v775, %v1123
        %v1125 = vpop.f32.mrf.mxu0
        %v1126 = vpop.f32.mrf.mxu0
        %v1127 = vadd.f32 %v776, %v1126
        %v1128 = vpop.f32.mrf.mxu0
        %1129 = vdwg.mxu0
        %v1130 = vsel %vm884, %v1073, -inf
        %1131 = vmax.xlane.f32.xlu0 %v1130
        %v1132 = vpop.xlane.xlu0 %1131
        %v1133 = vsel %vm884, %v1076, -inf
        %1134 = vmax.xlane.f32.xlu0 %v1133
        %v1135 = vpop.xlane.xlu0 %1134
        %v1136 = vsel %vm884, %v1124, -inf
        %1137 = vmax.xlane.f32.xlu0 %v1136
        %v1138 = vpop.xlane.xlu0 %1137
        %v1139 = vsel %vm884, %v1127, -inf
        %1140 = vmax.xlane.f32.xlu0 %v1139
        %v1141 = vpop.xlane.xlu0 %1140
        %v1142 = vsub.f32 %v1073, %v1132
        %v1143 = vsub.f32 %v1076, %v1135
        %v1144 = vsub.f32 %v1124, %v1138
        %v1145 = vsub.f32 %v1127, %v1141
        %v1146 = vmul.f32 %v1142, 1.442695
        %v1147 = vpow.pop %v1146
        %v1148 = vmul.f32 %v1143, 1.442695
        %v1149 = vpow.pop %v1148
        %v1150 = vmul.f32 %v1144, 1.442695
        %v1151 = vpow.pop %v1150
        %v1152 = vmul.f32 %v1145, 1.442695
        %v1153 = vpow.pop %v1152
        %v1154 = vsel %vm884, %v1147, 0.0
        %1155 = vadd.xlane.f32.xlu0 %v1154
        %v1156 = vpop.xlane.xlu0 %1155
        %v1157 = vsel %vm884, %v1149, 0.0
        %1158 = vadd.xlane.f32.xlu0 %v1157
        %v1159 = vpop.xlane.xlu0 %1158
        %v1160 = vsel %vm884, %v1151, 0.0
        %1161 = vadd.xlane.f32.xlu0 %v1160
        %v1162 = vpop.xlane.xlu0 %1161
        %v1163 = vsel %vm884, %v1153, 0.0
        %1164 = vadd.xlane.f32.xlu0 %v1163
        %v1165 = vpop.xlane.xlu0 %1164
        %v1166 = vrcp.pop %v1156
        %v1167 = vrcp.pop %v1159
        %v1168 = vrcp.pop %v1162
        %v1169 = vrcp.pop %v1165
        %v1170 = vmul.f32 %v1147, %v1166
        %v1171 = vmul.f32 %v1149, %v1167
        %v1172 = vmul.f32 %v1151, %v1168
        %v1173 = vmul.f32 %v1153, %v1169
        %v1174 = vpack.c.bf16 %v1171, %v1170
        %v1175 = vpack.c.bf16 %v1173, %v1172
        %1176 = vrot.lane.b32.xlu0 %v781, 56
        %v1177 = vpop.permute.xlu0 %1176
        %v1180 = vsel %vm884, %v1174, 0
        %1182 = vmatprep.subr.bf16.mxu0 0
        %1183 = vmatpush1.bf16.msra.mxu0 0
        %1184 = vmatprep.subr.bf16.mxu0 0
        %1185 = vmatpush1.bf16.msra.mxu0 0
        %1186 = vmatprep.subr.bf16.mxu0 0
        %1187 = vmatpush1.bf16.msra.mxu0 0
        %1188 = vmatprep.subr.bf16.mxu0 0
        %1189 = vmatpush1.bf16.msra.mxu0 0
        %1190 = vmatprep.subr.bf16.mxu0 0
        %1191 = vmatpush1.bf16.msra.mxu0 0
        %1192 = vmatprep.subr.bf16.mxu0 0
        %1193 = vmatpush1.bf16.msra.mxu0 0
        %1194 = vmatprep.subr.bf16.mxu0 0
        %1195 = vmatpush1.bf16.msra.mxu0 0
        %1196 = vmatprep.subr.bf16.mxu0 0
        %1197 = vmatpush1.bf16.msra.mxu0 %v1177
        %1198 = vmatprep.subr.bf16.mxu0 0
        %1199 = vmatpush2.bf16.msra.mxu0 0
        %1200 = vmatprep.subr.bf16.mxu0 0
        %1201 = vmatpush2.bf16.msra.mxu0 0
        %1202 = vmatprep.subr.bf16.mxu0 0
        %1203 = vmatpush2.bf16.msra.mxu0 0
        %1204 = vmatprep.subr.bf16.mxu0 0
        %1205 = vmatpush2.bf16.msra.mxu0 0
        %1206 = vmatprep.subr.bf16.mxu0 0
        %1207 = vmatpush2.bf16.msra.mxu0 0
        %1208 = vmatprep.subr.bf16.mxu0 0
        %1209 = vmatpush2.bf16.msra.mxu0 0
        %1210 = vmatprep.subr.bf16.mxu0 0
        %1211 = vmatpush2.bf16.msra.mxu0 0
        %1212 = vmatprep.subr.bf16.mxu0 0
        %1213 = vmatpush2.bf16.msra.mxu0 0
        %1214 = vmatprep.mubr.bf16.mxu0 0
        %1215 = vmatmul.mubr.bf16.gmra.mxu0 %v1180
        %v1216 = vpop.f32.mrf.mxu0
        %v1217 = vadd.f32 0.0, %v1216
        %v1218 = vpop.f32.mrf.mxu0
        %v1219 = vpop.f32.mrf.mxu0
        %v1220 = vadd.f32 0.0, %v1219
        %v1221 = vpop.f32.mrf.mxu0
        %1222 = vdwg.mxu0
        %1223 = vrot.lane.b32.xlu0 %v782, 56
        %v1224 = vpop.permute.xlu0 %1223
        %v1227 = vsel %vm884, %v1175, 0
        %1229 = vmatprep.subr.bf16.mxu0 0
        %1230 = vmatpush1.bf16.msra.mxu0 0
        %1231 = vmatprep.subr.bf16.mxu0 0
        %1232 = vmatpush1.bf16.msra.mxu0 0
        %1233 = vmatprep.subr.bf16.mxu0 0
        %1234 = vmatpush1.bf16.msra.mxu0 0
        %1235 = vmatprep.subr.bf16.mxu0 0
        %1236 = vmatpush1.bf16.msra.mxu0 0
        %1237 = vmatprep.subr.bf16.mxu0 0
        %1238 = vmatpush1.bf16.msra.mxu0 0
        %1239 = vmatprep.subr.bf16.mxu0 0
        %1240 = vmatpush1.bf16.msra.mxu0 0
        %1241 = vmatprep.subr.bf16.mxu0 0
        %1242 = vmatpush1.bf16.msra.mxu0 0
        %1243 = vmatprep.subr.bf16.mxu0 0
        %1244 = vmatpush1.bf16.msra.mxu0 %v1224
        %1245 = vmatprep.subr.bf16.mxu0 0
        %1246 = vmatpush2.bf16.msra.mxu0 0
        %1247 = vmatprep.subr.bf16.mxu0 0
        %1248 = vmatpush2.bf16.msra.mxu0 0
        %1249 = vmatprep.subr.bf16.mxu0 0
        %1250 = vmatpush2.bf16.msra.mxu0 0
        %1251 = vmatprep.subr.bf16.mxu0 0
        %1252 = vmatpush2.bf16.msra.mxu0 0
        %1253 = vmatprep.subr.bf16.mxu0 0
        %1254 = vmatpush2.bf16.msra.mxu0 0
        %1255 = vmatprep.subr.bf16.mxu0 0
        %1256 = vmatpush2.bf16.msra.mxu0 0
        %1257 = vmatprep.subr.bf16.mxu0 0
        %1258 = vmatpush2.bf16.msra.mxu0 0
        %1259 = vmatprep.subr.bf16.mxu0 0
        %1260 = vmatpush2.bf16.msra.mxu0 0
        %1261 = vmatprep.mubr.bf16.mxu0 0
        %1262 = vmatmul.mubr.bf16.gmra.mxu0 %v1227
        %v1263 = vpop.f32.mrf.mxu0
        %v1264 = vadd.f32 0.0, %v1263
        %v1265 = vpop.f32.mrf.mxu0
        %v1266 = vpop.f32.mrf.mxu0
        %v1267 = vadd.f32 0.0, %v1266
        %v1268 = vpop.f32.mrf.mxu0
        %1269 = vdwg.mxu0
        %v1270 = vpack.c.bf16 %v1220, %v1217
        %v1271 = vpack.c.bf16 %v1267, %v1264
        %s1272 = scalar_lea.vmem [#allocation8], 4
        %v1273 = vld [vmem:[%s1272] sm:$0xf]
        %v1275 = vsel %vm786, %v1270, 0
        %v1278 = vsel %vm786, %v1271, 0
        %vm1280 = vcmask 1043456
        %v1282 = vsel %vm1280, %v1273, 0
        %1284 = vmatprep.subr.bf16.mxu0 0
        %1285 = vmatpush1.bf16.msra.mxu0 0
        %1286 = vmatprep.subr.bf16.mxu0 0
        %1287 = vmatpush1.bf16.msra.mxu0 0
        %1288 = vmatprep.subr.bf16.mxu0 0
        %1289 = vmatpush1.bf16.msra.mxu0 0
        %1290 = vmatprep.subr.bf16.mxu0 0
        %1291 = vmatpush1.bf16.msra.mxu0 0
        %1292 = vmatprep.subr.bf16.mxu0 0
        %1293 = vmatpush1.bf16.msra.mxu0 0
        %1294 = vmatprep.subr.bf16.mxu0 0
        %1295 = vmatpush1.bf16.msra.mxu0 0
        %1296 = vmatprep.subr.bf16.mxu0 0
        %1297 = vmatpush1.bf16.msra.mxu0 0
        %1298 = vmatprep.subr.bf16.mxu0 0
        %1299 = vmatpush1.bf16.msra.mxu0 %v1282
        %1300 = vmatprep.subr.bf16.mxu0 0
        %1301 = vmatpush2.bf16.msra.mxu0 0
        %1302 = vmatprep.subr.bf16.mxu0 0
        %1303 = vmatpush2.bf16.msra.mxu0 0
        %1304 = vmatprep.subr.bf16.mxu0 0
        %1305 = vmatpush2.bf16.msra.mxu0 0
        %1306 = vmatprep.subr.bf16.mxu0 0
        %1307 = vmatpush2.bf16.msra.mxu0 0
        %1308 = vmatprep.subr.bf16.mxu0 0
        %1309 = vmatpush2.bf16.msra.mxu0 0
        %1310 = vmatprep.subr.bf16.mxu0 0
        %1311 = vmatpush2.bf16.msra.mxu0 0
        %1312 = vmatprep.subr.bf16.mxu0 0
        %1313 = vmatpush2.bf16.msra.mxu0 0
        %1314 = vmatprep.subr.bf16.mxu0 0
        %1315 = vmatpush2.bf16.msra.mxu0 0
        %1316 = vmatprep.mubr.bf16.mxu0 0
        %1317 = vmatmul.mubr.bf16.gmra.mxu0 %v1275
        %v1318 = vpop.f32.mrf.mxu0
        %v1319 = vadd.f32 0.0, %v1318
        %v1320 = vpop.f32.mrf.mxu0
        %v1321 = vpop.f32.mrf.mxu0
        %v1322 = vadd.f32 0.0, %v1321
        %v1323 = vpop.f32.mrf.mxu0
        %1324 = vmatprep.mubr.bf16.mxu0 0
        %1325 = vmatmul.mubr.bf16.gmra.mxu0 %v1278
        %v1326 = vpop.f32.mrf.mxu0
        %v1327 = vadd.f32 0.0, %v1326
        %v1328 = vpop.f32.mrf.mxu0
        %v1329 = vpop.f32.mrf.mxu0
        %v1330 = vadd.f32 0.0, %v1329
        %v1331 = vpop.f32.mrf.mxu0
        %1332 = vdwg.mxu0
        %v1334 = vsel %vm786, %v1025, 0
        %v1337 = vsel %vm786, %v1026, 0
        %v1340 = vsel %vm1280, %v1027, 0
        %1342 = vmatprep.subr.bf16.mxu0 0
        %1343 = vmatpush1.bf16.msra.mxu0 0
        %1344 = vmatprep.subr.bf16.mxu0 0
        %1345 = vmatpush1.bf16.msra.mxu0 0
        %1346 = vmatprep.subr.bf16.mxu0 0
        %1347 = vmatpush1.bf16.msra.mxu0 0
        %1348 = vmatprep.subr.bf16.mxu0 0
        %1349 = vmatpush1.bf16.msra.mxu0 0
        %1350 = vmatprep.subr.bf16.mxu0 0
        %1351 = vmatpush1.bf16.msra.mxu0 0
        %1352 = vmatprep.subr.bf16.mxu0 0
        %1353 = vmatpush1.bf16.msra.mxu0 0
        %1354 = vmatprep.subr.bf16.mxu0 0
        %1355 = vmatpush1.bf16.msra.mxu0 0
        %1356 = vmatprep.subr.bf16.mxu0 0
        %1357 = vmatpush1.bf16.msra.mxu0 %v1340
        %1358 = vmatprep.subr.bf16.mxu0 0
        %1359 = vmatpush2.bf16.msra.mxu0 0
        %1360 = vmatprep.subr.bf16.mxu0 0
        %1361 = vmatpush2.bf16.msra.mxu0 0
        %1362 = vmatprep.subr.bf16.mxu0 0
        %1363 = vmatpush2.bf16.msra.mxu0 0
        %1364 = vmatprep.subr.bf16.mxu0 0
        %1365 = vmatpush2.bf16.msra.mxu0 0
        %1366 = vmatprep.subr.bf16.mxu0 0
        %1367 = vmatpush2.bf16.msra.mxu0 0
        %1368 = vmatprep.subr.bf16.mxu0 0
        %1369 = vmatpush2.bf16.msra.mxu0 0
        %1370 = vmatprep.subr.bf16.mxu0 0
        %1371 = vmatpush2.bf16.msra.mxu0 0
        %1372 = vmatprep.subr.bf16.mxu0 0
        %1373 = vmatpush2.bf16.msra.mxu0 0
        %1374 = vmatprep.mubr.bf16.mxu0 0
        %1375 = vmatmul.mubr.bf16.gmra.mxu0 %v1334
        %v1376 = vpop.f32.mrf.mxu0
        %v1377 = vadd.f32 %v1319, %v1376
        %v1378 = vpop.f32.mrf.mxu0
        %v1379 = vpop.f32.mrf.mxu0
        %v1380 = vadd.f32 %v1322, %v1379
        %v1381 = vpop.f32.mrf.mxu0
        %1382 = vmatprep.mubr.bf16.mxu0 0
        %1383 = vmatmul.mubr.bf16.gmra.mxu0 %v1337
        %v1384 = vpop.f32.mrf.mxu0
        %v1385 = vadd.f32 %v1327, %v1384
        %v1386 = vpop.f32.mrf.mxu0
        %v1387 = vpop.f32.mrf.mxu0
        %v1388 = vadd.f32 %v1330, %v1387
        %v1389 = vpop.f32.mrf.mxu0
        %1390 = vdwg.mxu0
        %1391 = vrot.lane.b32.xlu0 %v781, 112
        %v1392 = vpop.permute.xlu0 %1391
        %1393 = vrot.lane.b32.xlu0 %v781, 80
        %v1394 = vpop.permute.xlu0 %1393
        %v1396 = vsel %vm786, %v1392, 0
        %v1399 = vsel %vm786, %v1394, 0
        %1401 = vmatprep.subr.bf16.mxu0 0
        %1402 = vmatpush1.bf16.xpose.msra.mxu0 0
        %1403 = vmatprep.subr.bf16.mxu0 0
        %1404 = vmatpush1.bf16.xpose.msra.mxu0 0
        %1405 = vmatprep.subr.bf16.mxu0 0
        %1406 = vmatpush1.bf16.xpose.msra.mxu0 0
        %1407 = vmatprep.subr.bf16.mxu0 0
        %1408 = vmatpush1.bf16.xpose.msra.mxu0 0
        %1409 = vmatprep.subr.bf16.mxu0 0
        %1410 = vmatpush1.bf16.xpose.msra.mxu0 0
        %1411 = vmatprep.subr.bf16.mxu0 0
        %1412 = vmatpush1.bf16.xpose.msra.mxu0 0
        %1413 = vmatprep.subr.bf16.mxu0 0
        %1414 = vmatpush1.bf16.xpose.msra.mxu0 0
        %1415 = vmatprep.subr.bf16.mxu0 0
        %1416 = vmatpush1.bf16.xpose.msra.mxu0 %v1399
        %1417 = vmatprep.subr.bf16.mxu0 0
        %1418 = vmatpush2.bf16.xpose.msra.mxu0 0
        %1419 = vmatprep.subr.bf16.mxu0 0
        %1420 = vmatpush2.bf16.xpose.msra.mxu0 0
        %1421 = vmatprep.subr.bf16.mxu0 0
        %1422 = vmatpush2.bf16.xpose.msra.mxu0 0
        %1423 = vmatprep.subr.bf16.mxu0 0
        %1424 = vmatpush2.bf16.xpose.msra.mxu0 0
        %1425 = vmatprep.subr.bf16.mxu0 0
        %1426 = vmatpush2.bf16.xpose.msra.mxu0 0
        %1427 = vmatprep.subr.bf16.mxu0 0
        %1428 = vmatpush2.bf16.xpose.msra.mxu0 0
        %1429 = vmatprep.subr.bf16.mxu0 0
        %1430 = vmatpush2.bf16.xpose.msra.mxu0 0
        %1431 = vmatprep.subr.bf16.mxu0 0
        %1432 = vmatpush2.bf16.xpose.msra.mxu0 0
        %1433 = vmatprep.mubr.bf16.mxu0 0
        %1434 = vmatmul.mubr.bf16.gmra.mxu0 %v1396
        %v1435 = vpop.f32.mrf.mxu0
        %v1436 = vadd.f32 %v777, %v1435
        %v1437 = vpop.f32.mrf.mxu0
        %v1438 = vpop.f32.mrf.mxu0
        %v1439 = vadd.f32 %v778, %v1438
        %v1440 = vpop.f32.mrf.mxu0
        %1441 = vdwg.mxu0
        %1442 = vrot.lane.b32.xlu0 %v782, 112
        %v1443 = vpop.permute.xlu0 %1442
        %1444 = vrot.lane.b32.xlu0 %v782, 80
        %v1445 = vpop.permute.xlu0 %1444
        %v1447 = vsel %vm786, %v1443, 0
        %v1450 = vsel %vm786, %v1445, 0
        %1452 = vmatprep.subr.bf16.mxu0 0
        %1453 = vmatpush1.bf16.xpose.msra.mxu0 0
        %1454 = vmatprep.subr.bf16.mxu0 0
        %1455 = vmatpush1.bf16.xpose.msra.mxu0 0
        %1456 = vmatprep.subr.bf16.mxu0 0
        %1457 = vmatpush1.bf16.xpose.msra.mxu0 0
        %1458 = vmatprep.subr.bf16.mxu0 0
        %1459 = vmatpush1.bf16.xpose.msra.mxu0 0
        %1460 = vmatprep.subr.bf16.mxu0 0
        %1461 = vmatpush1.bf16.xpose.msra.mxu0 0
        %1462 = vmatprep.subr.bf16.mxu0 0
        %1463 = vmatpush1.bf16.xpose.msra.mxu0 0
        %1464 = vmatprep.subr.bf16.mxu0 0
        %1465 = vmatpush1.bf16.xpose.msra.mxu0 0
        %1466 = vmatprep.subr.bf16.mxu0 0
        %1467 = vmatpush1.bf16.xpose.msra.mxu0 %v1450
        %1468 = vmatprep.subr.bf16.mxu0 0
        %1469 = vmatpush2.bf16.xpose.msra.mxu0 0
        %1470 = vmatprep.subr.bf16.mxu0 0
        %1471 = vmatpush2.bf16.xpose.msra.mxu0 0
        %1472 = vmatprep.subr.bf16.mxu0 0
        %1473 = vmatpush2.bf16.xpose.msra.mxu0 0
        %1474 = vmatprep.subr.bf16.mxu0 0
        %1475 = vmatpush2.bf16.xpose.msra.mxu0 0
        %1476 = vmatprep.subr.bf16.mxu0 0
        %1477 = vmatpush2.bf16.xpose.msra.mxu0 0
        %1478 = vmatprep.subr.bf16.mxu0 0
        %1479 = vmatpush2.bf16.xpose.msra.mxu0 0
        %1480 = vmatprep.subr.bf16.mxu0 0
        %1481 = vmatpush2.bf16.xpose.msra.mxu0 0
        %1482 = vmatprep.subr.bf16.mxu0 0
        %1483 = vmatpush2.bf16.xpose.msra.mxu0 0
        %1484 = vmatprep.mubr.bf16.mxu0 0
        %1485 = vmatmul.mubr.bf16.gmra.mxu0 %v1447
        %v1486 = vpop.f32.mrf.mxu0
        %v1487 = vadd.f32 %v777, %v1486
        %v1488 = vpop.f32.mrf.mxu0
        %v1489 = vpop.f32.mrf.mxu0
        %v1490 = vadd.f32 %v778, %v1489
        %v1491 = vpop.f32.mrf.mxu0
        %1492 = vdwg.mxu0
        %v1493 = vsel %vm884, %v1436, -inf
        %1494 = vmax.xlane.f32.xlu0 %v1493
        %v1495 = vpop.xlane.xlu0 %1494
        %v1496 = vsel %vm884, %v1439, -inf
        %1497 = vmax.xlane.f32.xlu0 %v1496
        %v1498 = vpop.xlane.xlu0 %1497
        %v1499 = vsel %vm884, %v1487, -inf
        %1500 = vmax.xlane.f32.xlu0 %v1499
        %v1501 = vpop.xlane.xlu0 %1500
        %v1502 = vsel %vm884, %v1490, -inf
        %1503 = vmax.xlane.f32.xlu0 %v1502
        %v1504 = vpop.xlane.xlu0 %1503
        %v1505 = vsub.f32 %v1436, %v1495
        %v1506 = vsub.f32 %v1439, %v1498
        %v1507 = vsub.f32 %v1487, %v1501
        %v1508 = vsub.f32 %v1490, %v1504
        %v1509 = vmul.f32 %v1505, 1.442695
        %v1510 = vpow.pop %v1509
        %v1511 = vmul.f32 %v1506, 1.442695
        %v1512 = vpow.pop %v1511
        %v1513 = vmul.f32 %v1507, 1.442695
        %v1514 = vpow.pop %v1513
        %v1515 = vmul.f32 %v1508, 1.442695
        %v1516 = vpow.pop %v1515
        %v1517 = vsel %vm884, %v1510, 0.0
        %1518 = vadd.xlane.f32.xlu0 %v1517
        %v1519 = vpop.xlane.xlu0 %1518
        %v1520 = vsel %vm884, %v1512, 0.0
        %1521 = vadd.xlane.f32.xlu0 %v1520
        %v1522 = vpop.xlane.xlu0 %1521
        %v1523 = vsel %vm884, %v1514, 0.0
        %1524 = vadd.xlane.f32.xlu0 %v1523
        %v1525 = vpop.xlane.xlu0 %1524
        %v1526 = vsel %vm884, %v1516, 0.0
        %1527 = vadd.xlane.f32.xlu0 %v1526
        %v1528 = vpop.xlane.xlu0 %1527
        %v1529 = vrcp.pop %v1519
        %v1530 = vrcp.pop %v1522
        %v1531 = vrcp.pop %v1525
        %v1532 = vrcp.pop %v1528
        %v1533 = vmul.f32 %v1510, %v1529
        %v1534 = vmul.f32 %v1512, %v1530
        %v1535 = vmul.f32 %v1514, %v1531
        %v1536 = vmul.f32 %v1516, %v1532
        %v1537 = vpack.c.bf16 %v1534, %v1533
        %v1538 = vpack.c.bf16 %v1536, %v1535
        %1539 = vrot.lane.b32.xlu0 %v781, 48
        %v1540 = vpop.permute.xlu0 %1539
        %v1543 = vsel %vm884, %v1537, 0
        %1545 = vmatprep.subr.bf16.mxu0 0
        %1546 = vmatpush1.bf16.msra.mxu0 0
        %1547 = vmatprep.subr.bf16.mxu0 0
        %1548 = vmatpush1.bf16.msra.mxu0 0
        %1549 = vmatprep.subr.bf16.mxu0 0
        %1550 = vmatpush1.bf16.msra.mxu0 0
        %1551 = vmatprep.subr.bf16.mxu0 0
        %1552 = vmatpush1.bf16.msra.mxu0 0
        %1553 = vmatprep.subr.bf16.mxu0 0
        %1554 = vmatpush1.bf16.msra.mxu0 0
        %1555 = vmatprep.subr.bf16.mxu0 0
        %1556 = vmatpush1.bf16.msra.mxu0 0
        %1557 = vmatprep.subr.bf16.mxu0 0
        %1558 = vmatpush1.bf16.msra.mxu0 0
        %1559 = vmatprep.subr.bf16.mxu0 0
        %1560 = vmatpush1.bf16.msra.mxu0 %v1540
        %1561 = vmatprep.subr.bf16.mxu0 0
        %1562 = vmatpush2.bf16.msra.mxu0 0
        %1563 = vmatprep.subr.bf16.mxu0 0
        %1564 = vmatpush2.bf16.msra.mxu0 0
        %1565 = vmatprep.subr.bf16.mxu0 0
        %1566 = vmatpush2.bf16.msra.mxu0 0
        %1567 = vmatprep.subr.bf16.mxu0 0
        %1568 = vmatpush2.bf16.msra.mxu0 0
        %1569 = vmatprep.subr.bf16.mxu0 0
        %1570 = vmatpush2.bf16.msra.mxu0 0
        %1571 = vmatprep.subr.bf16.mxu0 0
        %1572 = vmatpush2.bf16.msra.mxu0 0
        %1573 = vmatprep.subr.bf16.mxu0 0
        %1574 = vmatpush2.bf16.msra.mxu0 0
        %1575 = vmatprep.subr.bf16.mxu0 0
        %1576 = vmatpush2.bf16.msra.mxu0 0
        %1577 = vmatprep.mubr.bf16.mxu0 0
        %1578 = vmatmul.mubr.bf16.gmra.mxu0 %v1543
        %v1579 = vpop.f32.mrf.mxu0
        %v1580 = vadd.f32 0.0, %v1579
        %v1581 = vpop.f32.mrf.mxu0
        %v1582 = vpop.f32.mrf.mxu0
        %v1583 = vadd.f32 0.0, %v1582
        %v1584 = vpop.f32.mrf.mxu0
        %1585 = vdwg.mxu0
        %1586 = vrot.lane.b32.xlu0 %v782, 48
        %v1587 = vpop.permute.xlu0 %1586
        %v1590 = vsel %vm884, %v1538, 0
        %1592 = vmatprep.subr.bf16.mxu0 0
        %1593 = vmatpush1.bf16.msra.mxu0 0
        %1594 = vmatprep.subr.bf16.mxu0 0
        %1595 = vmatpush1.bf16.msra.mxu0 0
        %1596 = vmatprep.subr.bf16.mxu0 0
        %1597 = vmatpush1.bf16.msra.mxu0 0
        %1598 = vmatprep.subr.bf16.mxu0 0
        %1599 = vmatpush1.bf16.msra.mxu0 0
        %1600 = vmatprep.subr.bf16.mxu0 0
        %1601 = vmatpush1.bf16.msra.mxu0 0
        %1602 = vmatprep.subr.bf16.mxu0 0
        %1603 = vmatpush1.bf16.msra.mxu0 0
        %1604 = vmatprep.subr.bf16.mxu0 0
        %1605 = vmatpush1.bf16.msra.mxu0 0
        %1606 = vmatprep.subr.bf16.mxu0 0
        %1607 = vmatpush1.bf16.msra.mxu0 %v1587
        %1608 = vmatprep.subr.bf16.mxu0 0
        %1609 = vmatpush2.bf16.msra.mxu0 0
        %1610 = vmatprep.subr.bf16.mxu0 0
        %1611 = vmatpush2.bf16.msra.mxu0 0
        %1612 = vmatprep.subr.bf16.mxu0 0
        %1613 = vmatpush2.bf16.msra.mxu0 0
        %1614 = vmatprep.subr.bf16.mxu0 0
        %1615 = vmatpush2.bf16.msra.mxu0 0
        %1616 = vmatprep.subr.bf16.mxu0 0
        %1617 = vmatpush2.bf16.msra.mxu0 0
        %1618 = vmatprep.subr.bf16.mxu0 0
        %1619 = vmatpush2.bf16.msra.mxu0 0
        %1620 = vmatprep.subr.bf16.mxu0 0
        %1621 = vmatpush2.bf16.msra.mxu0 0
        %1622 = vmatprep.subr.bf16.mxu0 0
        %1623 = vmatpush2.bf16.msra.mxu0 0
        %1624 = vmatprep.mubr.bf16.mxu0 0
        %1625 = vmatmul.mubr.bf16.gmra.mxu0 %v1590
        %v1626 = vpop.f32.mrf.mxu0
        %v1627 = vadd.f32 0.0, %v1626
        %v1628 = vpop.f32.mrf.mxu0
        %v1629 = vpop.f32.mrf.mxu0
        %v1630 = vadd.f32 0.0, %v1629
        %v1631 = vpop.f32.mrf.mxu0
        %1632 = vdwg.mxu0
        %v1633 = vpack.c.bf16 %v1583, %v1580
        %v1634 = vpack.c.bf16 %v1630, %v1627
        %s1635 = scalar_lea.vmem [#allocation8], 8
        %v1636 = vld [vmem:[%s1635] sm:$0xf]
        %v1638 = vsel %vm786, %v1633, 0
        %v1641 = vsel %vm786, %v1634, 0
        %v1644 = vsel %vm1280, %v1636, 0
        %1646 = vmatprep.subr.bf16.mxu0 0
        %1647 = vmatpush1.bf16.msra.mxu0 0
        %1648 = vmatprep.subr.bf16.mxu0 0
        %1649 = vmatpush1.bf16.msra.mxu0 0
        %1650 = vmatprep.subr.bf16.mxu0 0
        %1651 = vmatpush1.bf16.msra.mxu0 0
        %1652 = vmatprep.subr.bf16.mxu0 0
        %1653 = vmatpush1.bf16.msra.mxu0 0
        %1654 = vmatprep.subr.bf16.mxu0 0
        %1655 = vmatpush1.bf16.msra.mxu0 0
        %1656 = vmatprep.subr.bf16.mxu0 0
        %1657 = vmatpush1.bf16.msra.mxu0 0
        %1658 = vmatprep.subr.bf16.mxu0 0
        %1659 = vmatpush1.bf16.msra.mxu0 0
        %1660 = vmatprep.subr.bf16.mxu0 0
        %1661 = vmatpush1.bf16.msra.mxu0 %v1644
        %1662 = vmatprep.subr.bf16.mxu0 0
        %1663 = vmatpush2.bf16.msra.mxu0 0
        %1664 = vmatprep.subr.bf16.mxu0 0
        %1665 = vmatpush2.bf16.msra.mxu0 0
        %1666 = vmatprep.subr.bf16.mxu0 0
        %1667 = vmatpush2.bf16.msra.mxu0 0
        %1668 = vmatprep.subr.bf16.mxu0 0
        %1669 = vmatpush2.bf16.msra.mxu0 0
        %1670 = vmatprep.subr.bf16.mxu0 0
        %1671 = vmatpush2.bf16.msra.mxu0 0
        %1672 = vmatprep.subr.bf16.mxu0 0
        %1673 = vmatpush2.bf16.msra.mxu0 0
        %1674 = vmatprep.subr.bf16.mxu0 0
        %1675 = vmatpush2.bf16.msra.mxu0 0
        %1676 = vmatprep.subr.bf16.mxu0 0
        %1677 = vmatpush2.bf16.msra.mxu0 0
        %1678 = vmatprep.mubr.bf16.mxu0 0
        %1679 = vmatmul.mubr.bf16.gmra.mxu0 %v1638
        %v1680 = vpop.f32.mrf.mxu0
        %v1681 = vadd.f32 0.0, %v1680
        %v1682 = vpop.f32.mrf.mxu0
        %v1683 = vpop.f32.mrf.mxu0
        %v1684 = vadd.f32 0.0, %v1683
        %v1685 = vpop.f32.mrf.mxu0
        %1686 = vmatprep.mubr.bf16.mxu0 0
        %1687 = vmatmul.mubr.bf16.gmra.mxu0 %v1641
        %v1688 = vpop.f32.mrf.mxu0
        %v1689 = vadd.f32 0.0, %v1688
        %v1690 = vpop.f32.mrf.mxu0
        %v1691 = vpop.f32.mrf.mxu0
        %v1692 = vadd.f32 0.0, %v1691
        %v1693 = vpop.f32.mrf.mxu0
        %1694 = vdwg.mxu0
        %v1695 = vadd.f32 %v1377, %v1681
        %v1696 = vadd.f32 %v1380, %v1684
        %v1697 = vadd.f32 %v1385, %v1689
        %v1698 = vadd.f32 %v1388, %v1692
        %1699 = vrot.lane.b32.xlu0 %v781, 104
        %v1700 = vpop.permute.xlu0 %1699
        %1701 = vrot.lane.b32.xlu0 %v781, 72
        %v1702 = vpop.permute.xlu0 %1701
        %v1704 = vsel %vm786, %v1700, 0
        %v1707 = vsel %vm786, %v1702, 0
        %1709 = vmatprep.subr.bf16.mxu0 0
        %1710 = vmatpush1.bf16.xpose.msra.mxu0 0
        %1711 = vmatprep.subr.bf16.mxu0 0
        %1712 = vmatpush1.bf16.xpose.msra.mxu0 0
        %1713 = vmatprep.subr.bf16.mxu0 0
        %1714 = vmatpush1.bf16.xpose.msra.mxu0 0
        %1715 = vmatprep.subr.bf16.mxu0 0
        %1716 = vmatpush1.bf16.xpose.msra.mxu0 0
        %1717 = vmatprep.subr.bf16.mxu0 0
        %1718 = vmatpush1.bf16.xpose.msra.mxu0 0
        %1719 = vmatprep.subr.bf16.mxu0 0
        %1720 = vmatpush1.bf16.xpose.msra.mxu0 0
        %1721 = vmatprep.subr.bf16.mxu0 0
        %1722 = vmatpush1.bf16.xpose.msra.mxu0 0
        %1723 = vmatprep.subr.bf16.mxu0 0
        %1724 = vmatpush1.bf16.xpose.msra.mxu0 %v1707
        %1725 = vmatprep.subr.bf16.mxu0 0
        %1726 = vmatpush2.bf16.xpose.msra.mxu0 0
        %1727 = vmatprep.subr.bf16.mxu0 0
        %1728 = vmatpush2.bf16.xpose.msra.mxu0 0
        %1729 = vmatprep.subr.bf16.mxu0 0
        %1730 = vmatpush2.bf16.xpose.msra.mxu0 0
        %1731 = vmatprep.subr.bf16.mxu0 0
        %1732 = vmatpush2.bf16.xpose.msra.mxu0 0
        %1733 = vmatprep.subr.bf16.mxu0 0
        %1734 = vmatpush2.bf16.xpose.msra.mxu0 0
        %1735 = vmatprep.subr.bf16.mxu0 0
        %1736 = vmatpush2.bf16.xpose.msra.mxu0 0
        %1737 = vmatprep.subr.bf16.mxu0 0
        %1738 = vmatpush2.bf16.xpose.msra.mxu0 0
        %1739 = vmatprep.subr.bf16.mxu0 0
        %1740 = vmatpush2.bf16.xpose.msra.mxu0 0
        %1741 = vmatprep.mubr.bf16.mxu0 0
        %1742 = vmatmul.mubr.bf16.gmra.mxu0 %v1704
        %v1743 = vpop.f32.mrf.mxu0
        %v1744 = vadd.f32 %v779, %v1743
        %v1745 = vpop.f32.mrf.mxu0
        %v1746 = vpop.f32.mrf.mxu0
        %v1747 = vadd.f32 %v780, %v1746
        %v1748 = vpop.f32.mrf.mxu0
        %1749 = vdwg.mxu0
        %1750 = vrot.lane.b32.xlu0 %v782, 104
        %v1751 = vpop.permute.xlu0 %1750
        %1752 = vrot.lane.b32.xlu0 %v782, 72
        %v1753 = vpop.permute.xlu0 %1752
        %v1755 = vsel %vm786, %v1751, 0
        %v1758 = vsel %vm786, %v1753, 0
        %1760 = vmatprep.subr.bf16.mxu0 0
        %1761 = vmatpush1.bf16.xpose.msra.mxu0 0
        %1762 = vmatprep.subr.bf16.mxu0 0
        %1763 = vmatpush1.bf16.xpose.msra.mxu0 0
        %1764 = vmatprep.subr.bf16.mxu0 0
        %1765 = vmatpush1.bf16.xpose.msra.mxu0 0
        %1766 = vmatprep.subr.bf16.mxu0 0
        %1767 = vmatpush1.bf16.xpose.msra.mxu0 0
        %1768 = vmatprep.subr.bf16.mxu0 0
        %1769 = vmatpush1.bf16.xpose.msra.mxu0 0
        %1770 = vmatprep.subr.bf16.mxu0 0
        %1771 = vmatpush1.bf16.xpose.msra.mxu0 0
        %1772 = vmatprep.subr.bf16.mxu0 0
        %1773 = vmatpush1.bf16.xpose.msra.mxu0 0
        %1774 = vmatprep.subr.bf16.mxu0 0
        %1775 = vmatpush1.bf16.xpose.msra.mxu0 %v1758
        %1776 = vmatprep.subr.bf16.mxu0 0
        %1777 = vmatpush2.bf16.xpose.msra.mxu0 0
        %1778 = vmatprep.subr.bf16.mxu0 0
        %1779 = vmatpush2.bf16.xpose.msra.mxu0 0
        %1780 = vmatprep.subr.bf16.mxu0 0
        %1781 = vmatpush2.bf16.xpose.msra.mxu0 0
        %1782 = vmatprep.subr.bf16.mxu0 0
        %1783 = vmatpush2.bf16.xpose.msra.mxu0 0
        %1784 = vmatprep.subr.bf16.mxu0 0
        %1785 = vmatpush2.bf16.xpose.msra.mxu0 0
        %1786 = vmatprep.subr.bf16.mxu0 0
        %1787 = vmatpush2.bf16.xpose.msra.mxu0 0
        %1788 = vmatprep.subr.bf16.mxu0 0
        %1789 = vmatpush2.bf16.xpose.msra.mxu0 0
        %1790 = vmatprep.subr.bf16.mxu0 0
        %1791 = vmatpush2.bf16.xpose.msra.mxu0 0
        %1792 = vmatprep.mubr.bf16.mxu0 0
        %1793 = vmatmul.mubr.bf16.gmra.mxu0 %v1755
        %v1794 = vpop.f32.mrf.mxu0
        %v1795 = vadd.f32 %v779, %v1794
        %v1796 = vpop.f32.mrf.mxu0
        %v1797 = vpop.f32.mrf.mxu0
        %v1798 = vadd.f32 %v780, %v1797
        %v1799 = vpop.f32.mrf.mxu0
        %1800 = vdwg.mxu0
        %v1801 = vsel %vm884, %v1744, -inf
        %1802 = vmax.xlane.f32.xlu0 %v1801
        %v1803 = vpop.xlane.xlu0 %1802
        %v1804 = vsel %vm884, %v1747, -inf
        %1805 = vmax.xlane.f32.xlu0 %v1804
        %v1806 = vpop.xlane.xlu0 %1805
        %v1807 = vsel %vm884, %v1795, -inf
        %1808 = vmax.xlane.f32.xlu0 %v1807
        %v1809 = vpop.xlane.xlu0 %1808
        %v1810 = vsel %vm884, %v1798, -inf
        %1811 = vmax.xlane.f32.xlu0 %v1810
        %v1812 = vpop.xlane.xlu0 %1811
        %v1813 = vsub.f32 %v1744, %v1803
        %v1814 = vsub.f32 %v1747, %v1806
        %v1815 = vsub.f32 %v1795, %v1809
        %v1816 = vsub.f32 %v1798, %v1812
        %v1817 = vmul.f32 %v1813, 1.442695
        %v1818 = vpow.pop %v1817
        %v1819 = vmul.f32 %v1814, 1.442695
        %v1820 = vpow.pop %v1819
        %v1821 = vmul.f32 %v1815, 1.442695
        %v1822 = vpow.pop %v1821
        %v1823 = vmul.f32 %v1816, 1.442695
        %v1824 = vpow.pop %v1823
        %v1825 = vsel %vm884, %v1818, 0.0
        %1826 = vadd.xlane.f32.xlu0 %v1825
        %v1827 = vpop.xlane.xlu0 %1826
        %v1828 = vsel %vm884, %v1820, 0.0
        %1829 = vadd.xlane.f32.xlu0 %v1828
        %v1830 = vpop.xlane.xlu0 %1829
        %v1831 = vsel %vm884, %v1822, 0.0
        %1832 = vadd.xlane.f32.xlu0 %v1831
        %v1833 = vpop.xlane.xlu0 %1832
        %v1834 = vsel %vm884, %v1824, 0.0
        %1835 = vadd.xlane.f32.xlu0 %v1834
        %v1836 = vpop.xlane.xlu0 %1835
        %v1837 = vrcp.pop %v1827
        %v1838 = vrcp.pop %v1830
        %v1839 = vrcp.pop %v1833
        %v1840 = vrcp.pop %v1836
        %v1841 = vmul.f32 %v1818, %v1837
        %v1842 = vmul.f32 %v1820, %v1838
        %v1843 = vmul.f32 %v1822, %v1839
        %v1844 = vmul.f32 %v1824, %v1840
        %v1845 = vpack.c.bf16 %v1842, %v1841
        %v1846 = vpack.c.bf16 %v1844, %v1843
        %1847 = vrot.lane.b32.xlu0 %v781, 40
        %v1848 = vpop.permute.xlu0 %1847
        %v1851 = vsel %vm884, %v1845, 0
        %1853 = vmatprep.subr.bf16.mxu0 0
        %1854 = vmatpush1.bf16.msra.mxu0 0
        %1855 = vmatprep.subr.bf16.mxu0 0
        %1856 = vmatpush1.bf16.msra.mxu0 0
        %1857 = vmatprep.subr.bf16.mxu0 0
        %1858 = vmatpush1.bf16.msra.mxu0 0
        %1859 = vmatprep.subr.bf16.mxu0 0
        %1860 = vmatpush1.bf16.msra.mxu0 0
        %1861 = vmatprep.subr.bf16.mxu0 0
        %1862 = vmatpush1.bf16.msra.mxu0 0
        %1863 = vmatprep.subr.bf16.mxu0 0
        %1864 = vmatpush1.bf16.msra.mxu0 0
        %1865 = vmatprep.subr.bf16.mxu0 0
        %1866 = vmatpush1.bf16.msra.mxu0 0
        %1867 = vmatprep.subr.bf16.mxu0 0
        %1868 = vmatpush1.bf16.msra.mxu0 %v1848
        %1869 = vmatprep.subr.bf16.mxu0 0
        %1870 = vmatpush2.bf16.msra.mxu0 0
        %1871 = vmatprep.subr.bf16.mxu0 0
        %1872 = vmatpush2.bf16.msra.mxu0 0
        %1873 = vmatprep.subr.bf16.mxu0 0
        %1874 = vmatpush2.bf16.msra.mxu0 0
        %1875 = vmatprep.subr.bf16.mxu0 0
        %1876 = vmatpush2.bf16.msra.mxu0 0
        %1877 = vmatprep.subr.bf16.mxu0 0
        %1878 = vmatpush2.bf16.msra.mxu0 0
        %1879 = vmatprep.subr.bf16.mxu0 0
        %1880 = vmatpush2.bf16.msra.mxu0 0
        %1881 = vmatprep.subr.bf16.mxu0 0
        %1882 = vmatpush2.bf16.msra.mxu0 0
        %1883 = vmatprep.subr.bf16.mxu0 0
        %1884 = vmatpush2.bf16.msra.mxu0 0
        %1885 = vmatprep.mubr.bf16.mxu0 0
        %1886 = vmatmul.mubr.bf16.gmra.mxu0 %v1851
        %v1887 = vpop.f32.mrf.mxu0
        %v1888 = vadd.f32 0.0, %v1887
        %v1889 = vpop.f32.mrf.mxu0
        %v1890 = vpop.f32.mrf.mxu0
        %v1891 = vadd.f32 0.0, %v1890
        %v1892 = vpop.f32.mrf.mxu0
        %1893 = vdwg.mxu0
        %1894 = vrot.lane.b32.xlu0 %v782, 40
        %v1895 = vpop.permute.xlu0 %1894
        %v1898 = vsel %vm884, %v1846, 0
        %1900 = vmatprep.subr.bf16.mxu0 0
        %1901 = vmatpush1.bf16.msra.mxu0 0
        %1902 = vmatprep.subr.bf16.mxu0 0
        %1903 = vmatpush1.bf16.msra.mxu0 0
        %1904 = vmatprep.subr.bf16.mxu0 0
        %1905 = vmatpush1.bf16.msra.mxu0 0
        %1906 = vmatprep.subr.bf16.mxu0 0
        %1907 = vmatpush1.bf16.msra.mxu0 0
        %1908 = vmatprep.subr.bf16.mxu0 0
        %1909 = vmatpush1.bf16.msra.mxu0 0
        %1910 = vmatprep.subr.bf16.mxu0 0
        %1911 = vmatpush1.bf16.msra.mxu0 0
        %1912 = vmatprep.subr.bf16.mxu0 0
        %1913 = vmatpush1.bf16.msra.mxu0 0
        %1914 = vmatprep.subr.bf16.mxu0 0
        %1915 = vmatpush1.bf16.msra.mxu0 %v1895
        %1916 = vmatprep.subr.bf16.mxu0 0
        %1917 = vmatpush2.bf16.msra.mxu0 0
        %1918 = vmatprep.subr.bf16.mxu0 0
        %1919 = vmatpush2.bf16.msra.mxu0 0
        %1920 = vmatprep.subr.bf16.mxu0 0
        %1921 = vmatpush2.bf16.msra.mxu0 0
        %1922 = vmatprep.subr.bf16.mxu0 0
        %1923 = vmatpush2.bf16.msra.mxu0 0
        %1924 = vmatprep.subr.bf16.mxu0 0
        %1925 = vmatpush2.bf16.msra.mxu0 0
        %1926 = vmatprep.subr.bf16.mxu0 0
        %1927 = vmatpush2.bf16.msra.mxu0 0
        %1928 = vmatprep.subr.bf16.mxu0 0
        %1929 = vmatpush2.bf16.msra.mxu0 0
        %1930 = vmatprep.subr.bf16.mxu0 0
        %1931 = vmatpush2.bf16.msra.mxu0 0
        %1932 = vmatprep.mubr.bf16.mxu0 0
        %1933 = vmatmul.mubr.bf16.gmra.mxu0 %v1898
        %v1934 = vpop.f32.mrf.mxu0
        %v1935 = vadd.f32 0.0, %v1934
        %v1936 = vpop.f32.mrf.mxu0
        %v1937 = vpop.f32.mrf.mxu0
        %v1938 = vadd.f32 0.0, %v1937
        %v1939 = vpop.f32.mrf.mxu0
        %1940 = vdwg.mxu0
        %v1941 = vpack.c.bf16 %v1891, %v1888
        %v1942 = vpack.c.bf16 %v1938, %v1935
        %s1943 = scalar_lea.vmem [#allocation8], 12
        %v1944 = vld [vmem:[%s1943] sm:$0xf]
        %v1946 = vsel %vm786, %v1941, 0
        %v1949 = vsel %vm786, %v1942, 0
        %v1952 = vsel %vm1280, %v1944, 0
        %1954 = vmatprep.subr.bf16.mxu0 0
        %1955 = vmatpush1.bf16.msra.mxu0 0
        %1956 = vmatprep.subr.bf16.mxu0 0
        %1957 = vmatpush1.bf16.msra.mxu0 0
        %1958 = vmatprep.subr.bf16.mxu0 0
        %1959 = vmatpush1.bf16.msra.mxu0 0
        %1960 = vmatprep.subr.bf16.mxu0 0
        %1961 = vmatpush1.bf16.msra.mxu0 0
        %1962 = vmatprep.subr.bf16.mxu0 0
        %1963 = vmatpush1.bf16.msra.mxu0 0
        %1964 = vmatprep.subr.bf16.mxu0 0
        %1965 = vmatpush1.bf16.msra.mxu0 0
        %1966 = vmatprep.subr.bf16.mxu0 0
        %1967 = vmatpush1.bf16.msra.mxu0 0
        %1968 = vmatprep.subr.bf16.mxu0 0
        %1969 = vmatpush1.bf16.msra.mxu0 %v1952
        %1970 = vmatprep.subr.bf16.mxu0 0
        %1971 = vmatpush2.bf16.msra.mxu0 0
        %1972 = vmatprep.subr.bf16.mxu0 0
        %1973 = vmatpush2.bf16.msra.mxu0 0
        %1974 = vmatprep.subr.bf16.mxu0 0
        %1975 = vmatpush2.bf16.msra.mxu0 0
        %1976 = vmatprep.subr.bf16.mxu0 0
        %1977 = vmatpush2.bf16.msra.mxu0 0
        %1978 = vmatprep.subr.bf16.mxu0 0
        %1979 = vmatpush2.bf16.msra.mxu0 0
        %1980 = vmatprep.subr.bf16.mxu0 0
        %1981 = vmatpush2.bf16.msra.mxu0 0
        %1982 = vmatprep.subr.bf16.mxu0 0
        %1983 = vmatpush2.bf16.msra.mxu0 0
        %1984 = vmatprep.subr.bf16.mxu0 0
        %1985 = vmatpush2.bf16.msra.mxu0 0
        %1986 = vmatprep.mubr.bf16.mxu0 0
        %1987 = vmatmul.mubr.bf16.gmra.mxu0 %v1946
        %v1988 = vpop.f32.mrf.mxu0
        %v1989 = vadd.f32 0.0, %v1988
        %v1990 = vpop.f32.mrf.mxu0
        %v1991 = vpop.f32.mrf.mxu0
        %v1992 = vadd.f32 0.0, %v1991
        %v1993 = vpop.f32.mrf.mxu0
        %1994 = vmatprep.mubr.bf16.mxu0 0
        %1995 = vmatmul.mubr.bf16.gmra.mxu0 %v1949
        %v1996 = vpop.f32.mrf.mxu0
        %v1997 = vadd.f32 0.0, %v1996
        %v1998 = vpop.f32.mrf.mxu0
        %v1999 = vpop.f32.mrf.mxu0
        %v2000 = vadd.f32 0.0, %v1999
        %v2001 = vpop.f32.mrf.mxu0
        %2002 = vdwg.mxu0
        %v2003 = vadd.f32 %v1695, %v1989
        %v2004 = vadd.f32 %v1696, %v1992
        %v2005 = vadd.f32 %v1697, %v1997
        %v2006 = vadd.f32 %v1698, %v2000
        %v2007 = vld [vmem:[%s7] sm:$0x1]
        %v2009 = vlaneseq
        %v2010 = vshrl.u32 %v2009, 7
        %v2011 = vsub.s32 0, %v2010
        %v2012 = vrot.slane %v2007, %v2011
        %v2014 = vadd.f32 %v2003, %v2012
        %v2015 = vadd.f32 %v2004, %v2012
        %v2016 = vadd.f32 %v2005, %v2012
        %v2017 = vadd.f32 %v2006, %v2012
        %v2022 = vcombine.high %v2014, %v2014
        %v2023 = vcombine.high %v2015, %v2015
        %v2024 = vcombine.high %v2016, %v2016
        %v2025 = vcombine.high %v2017, %v2017
        %v2028 = vcombine.low %v2016, %v2016
        %v2029 = vcombine.low %v2024, %v2024
        %v2030 = vcombine.low %v2017, %v2017
        %v2031 = vcombine.low %v2025, %v2025
        %v2036 = vsel %vm1280, %v2014, %v2028
        %v2037 = vsel %vm1280, %v2022, %v2029
        %v2038 = vsel %vm1280, %v2015, %v2030
        %v2039 = vsel %vm1280, %v2023, %v2031
        %v2040 = vpack.c.bf16 %v2036, %v2036
        %v2041 = vpack.c.bf16 %v2037, %v2037
        %v2042 = vpack.c.bf16 %v2038, %v2038
        %v2043 = vpack.c.bf16 %v2039, %v2039
        %vm2044 = vcmask 257024
        %2045 = vst.msk [vmem:[%s385] sm:$0xf] %vm2044, %v2040
        %2046 = vst.msk [vmem:[%s385 + $0x4] sm:$0xf] %vm2044, %v2041
        %2047 = vst.msk [vmem:[%s385 + $0x8] sm:$0xf] %vm2044, %v2042
        %2048 = vst.msk [vmem:[%s385 + $0xc] sm:$0xf] %vm2044, %v2043
        %s2049 = sand.u32 %s224, 1
        %s2050 = scalar_lea.sflag [#allocation4], %s2049
        %s2051 = sand.u32 %s224, 1
        %s2052 = smul.addr %s2051, 16
        %s2053 = scalar_lea.vmem [#allocation10], %s2052
        // Predicated region
        $region69: #{tpu_custom_call.1} parent=51 // pred_check
          %p2054 = pneg %p234
        $region70: #{tpu_custom_call.1} parent=51 // pred_check_branch
          %2056 = sbr.rel (%p2054) target = $region72
        $region71: #{tpu_custom_call.1} parent=51 // pred_region
          %s2057 = smul.u32 4, %s32
          %s2059 = ssub.s32 256, 256
          %2060 = vsyncadd %s2050, %s2059
          %s2061 = smul.addr %s31, 8
          %s2062 = sadd.s32 %s2057, %s2061
          %s2063 = smul.addr %s2062, 64
          %s2064 = scalar_lea.hbm %s8, %s2063
          %s2065 = sshll.u32 %s2053, 4
          %s2066 = int_to_ptr.vmem [resolvable:$true] %s2065
          %2071 = dma.vmem_to_hbm [thread:$0]  %s2066, 256, %s2064, %s2050, 64, 64, 4
        $region72: #{tpu_custom_call.1} parent=51 // pred_fallthru
          _
      $region52: #{tpu_custom_call.1} parent=5 // pred_fallthru
        _
      %p2072 = scmp.le.s32.totalorder 2, %s22
      // Predicated region
      $region73: #{tpu_custom_call.1} parent=5 // pred_check
        %p2073 = pneg %p2072
      $region74: #{tpu_custom_call.1} parent=5 // pred_check_branch
        %2075 = sbr.rel (%p2073) target = $region76
      $region75: #{tpu_custom_call.1} parent=5 // pred_region
        %s2076 = ssub.s32 %s22, 2
        // Predicated region
        $region77: #{tpu_custom_call.1} parent=75 // pred_check
          %p2077 = pneg %p240
        $region78: #{tpu_custom_call.1} parent=75 // pred_check_branch
          %2079 = sbr.rel (%p2077) target = $region80
        $region79: #{tpu_custom_call.1} parent=75 // pred_region
          %s2080 = sand.u32 %s225, 1
          %s2081 = scalar_lea.sflag [#allocation4], %s2080
          %s2082 = sand.u32 %s225, 1
          %s2083 = smul.addr %s2082, 16
          %s2084 = scalar_lea.vmem [#allocation10], %s2083
          %2085 = dma.done %s2081, 256
        $region80: #{tpu_custom_call.1} parent=75 // pred_fallthru
          _
      $region76: #{tpu_custom_call.1} parent=5 // pred_fallthru
        _
    $region6: #{tpu_custom_call.1} parent=1 // loop_footer
      %s26 = sadd.s32 1, %s22
    $region7: #{tpu_custom_call.1} parent=1 // loop_footer_branch
      %21 = sbr.rel target = $region3
    $region8: #{tpu_custom_call.1} parent=1 // loop_exit
      _
    %2086 = vsyncpa [#allocation3], 1
    %s2087 = scalar_lea.sflag [#allocation3], 1
    %2088 = vsyncpa %s2087, 1
    %2089 = vsyncpa [#allocation6], 1
    %2090 = vsyncpa [#allocation9], 1
    %2091 = vsyncpa [#allocation4], 1
    %s2092 = scalar_lea.sflag [#allocation4], 1
    %2093 = vsyncpa %s2092, 1

</llo_original>
